<compile_context>
chip_gen: v5e
topology: v5e:2x2
jax: 0.10.0
libtpu: 0.0.40
codegen_flags: <defaults>
</compile_context>

<pallas_src>
import jax
import jax.numpy as jnp
from jax import lax
from jax.experimental import pallas as pl
from jax.experimental.pallas import tpu as pltpu


# ----------------------------------------------------------------------------
# Model configuration (small, synthetic)
# ----------------------------------------------------------------------------
N_SRC_F, N_TGT_F = 32, 32           # fine points per cloud
N_SRC_C, N_TGT_C = 16, 16           # coarse points per cloud (stride-2 pool)
N_F = N_SRC_F + N_TGT_F             # 64
N_C = N_SRC_C + N_TGT_C             # 32

IN_FEATS_DIM = 1                    # config.in_feats_dim
FIRST_FEATS_DIM = 32                # config.first_feats_dim
ENC_OUT_DIM = 64                    # encoder output after one strided stage
GNN_FEATS_DIM = 128                 # config.gnn_feats_dim
FINAL_FEATS_DIM = 32                # config.final_feats_dim
DEC_OUT_DIM = FINAL_FEATS_DIM + 2   # feats_f + (overlap, saliency) scores


def _mm(a, w_ref):
    """MXU matmul: bf16 operands, f32 accumulation (weights pre-cast to bf16)."""
    return jnp.dot(a.astype(jnp.bfloat16), w_ref[...],
                   preferred_element_type=jnp.float32)


# ----------------------------------------------------------------------------
# Fully fused KPFCNN forward kernel
# ----------------------------------------------------------------------------
def _kpfcnn_kernel(feat_ref,
                   e0w_ref, e0b_ref,
                   e1w_ref, e1b_ref,
                   bw_ref, bb_ref,
                   g0w_ref, g0b_ref,
                   g1w_ref, g1b_ref,
                   pgw_ref, pgb_ref, psw_ref,
                   dwf_f_ref, dwf_s_ref,
                   dwsc_f_ref, dwsc_s_ref,
                   dwk_f_ref, dwk_s_ref,
                   dbf_ref, dbs_ref,
                   eps_ref, psb_ref,
                   feats_out_ref, scores_out_ref):
    f32 = jnp.float32

    # ---- enc0 on all fine points (Cin=1 conv => pure VPU broadcast MAC). ----
    # This tensor is also the encoder skip feature for the decoder concat.
    skip = jnp.maximum(feat_ref[...] * e0w_ref[...] + e0b_ref[...], 0.0)      # [N_F, 32]

    # ---- stride-2 "strided" pooling to coarse points. ----------------------
    # enc0 is per-point, so pooling commutes with it; the pool is an exact 0/1
    # selection matmul built from iota (no strided slicing inside the kernel).
    c_ids = lax.broadcasted_iota(jnp.int32, (N_C, N_F), 0)
    f_ids = lax.broadcasted_iota(jnp.int32, (N_C, N_F), 1)
    sel = (f_ids == 2 * c_ids).astype(f32)                                    # [N_C, N_F]
    x = jnp.dot(sel, skip, preferred_element_type=f32)                        # [N_C, 32]

    # ---- encoder stage 1 / bottle / GNN / proj (all per-point matmuls). ----
    # TODO(synk): enc1 stands in for the strided KPConv block; gnn0/gnn1 stand
    # in for the DGCNN/attention GCN (needs kNN graph, per-point MLP here).
    x = jnp.maximum(_mm(x, e1w_ref) + e1b_ref[...], 0.0)                      # [N_C, 64]
    f = _mm(x, bw_ref) + bb_ref[...]                                          # bottle [N_C,128]
    h = jnp.maximum(_mm(f, g0w_ref) + g0b_ref[...], 0.0)
    f = _mm(h, g1w_ref) + g1b_ref[...]                                        # GNN out [N_C,128]

    feats_raw = _mm(f, pgw_ref) + pgb_ref[...]                                # proj_gnn [N_C,128]
    # proj_score has a single output channel: cross-lane reduction instead of
    # a 129-lane MXU result that would spill into a second lane group.
    scores_c = (jnp.sum(feats_raw * psw_ref[...], axis=1, keepdims=True)
                + psb_ref[0])                                                 # [N_C, 1]

    # F.normalize(p=2): one EUP rsqrt on the clamped sum of squares.
    fnorm = feats_raw * lax.rsqrt(
        jnp.maximum(jnp.sum(feats_raw * feats_raw, axis=1, keepdims=True), 1e-24))

    # ---- saliency mixing (temperature softmax over coarse correspondences). --
    # temperature = exp(epsilon) + 0.03, computed in-kernel from the SMEM scalar.
    inv_t = 1.0 / (jnp.exp(jnp.full((1, 1), eps_ref[0], dtype=f32)) + 0.03)   # [1,1]

    src_f, tgt_f = fnorm[:N_SRC_C], fnorm[N_SRC_C:]
    src_s, tgt_s = scores_c[:N_SRC_C], scores_c[N_SRC_C:]

    inner = lax.dot_general(src_f, tgt_f, (((1,), (1,)), ((), ())),
                            preferred_element_type=f32) * inv_t               # [Ns_c, Nt_c]

    # s1 = softmax(inner, dim=1) @ tgt_scores
    m1 = jnp.max(inner, axis=1, keepdims=True)
    p1 = jnp.exp(inner - m1)
    p1 = p1 * pl.reciprocal(jnp.sum(p1, axis=1, keepdims=True), approx=True)
    s1 = jnp.dot(p1, tgt_s, preferred_element_type=f32)                       # [Ns_c, 1]

    # s2 = softmax(inner.T, dim=1) @ src_scores — done as a column softmax over
    # `inner` (axis-0 reductions) + a dot_general contracting axis 0: no transpose.
    m2 = jnp.max(inner, axis=0, keepdims=True)
    p2 = jnp.exp(inner - m2)
    p2 = p2 * pl.reciprocal(jnp.sum(p2, axis=0, keepdims=True), approx=True)
    s2 = lax.dot_general(p2, src_s, (((0,), (0,)), ((), ())),
                         preferred_element_type=f32)                          # [Nt_c, 1]

    saliency = jnp.concatenate([s1, s2], axis=0)                              # [N_C, 1]

    # ---- decoder: split-K unary over [scores_c, saliency | feats | skip]. ---
    # Coarse-level contribution first (so the nearest upsample only touches it
    # once), output columns kept lane-separated as feats(32) and scores(2).
    dwsc_f = dwsc_f_ref[...]                                                  # [2, 32]
    dwsc_s = dwsc_s_ref[...]                                                  # [2, 2]
    base_f = (_mm(feats_raw, dwf_f_ref)
              + scores_c * dwsc_f[0:1, :]
              + saliency * dwsc_f[1:2, :])                                    # [N_C, 32]
    base_s = (_mm(feats_raw, dwf_s_ref)
              + scores_c * dwsc_s[0:1, :]
              + saliency * dwsc_s[1:2, :])                                    # [N_C, 2]

    # Nearest upsample coarse -> fine (fine j <- coarse j//2) as an exact 0/1
    # matmul built from iota (avoids jnp.repeat / strided stores in-kernel).
    fj = lax.broadcasted_iota(jnp.int32, (N_F, N_C), 0)
    cj = lax.broadcasted_iota(jnp.int32, (N_F, N_C), 1)
    d = fj - 2 * cj
    up = ((d == 0) | (d == 1)).astype(f32)                                    # [N_F, N_C]

    y_f = (jnp.dot(up, base_f, preferred_element_type=f32)
           + _mm(skip, dwk_f_ref) + dbf_ref[...])                             # [N_F, 32]
    y_s = (jnp.dot(up, base_s, preferred_element_type=f32)
           + _mm(skip, dwk_s_ref) + dbs_ref[...])                             # [N_F, 2]

    # ---- epilogue: final L2 normalize + sigmoid/clamp/NaN-guard scores. -----
    feats_out_ref[...] = y_f * lax.rsqrt(
        jnp.maximum(jnp.sum(y_f * y_f, axis=1, keepdims=True), 1e-24))
    sc = jnp.clip(jax.nn.sigmoid(y_s), 0.0, 1.0)
    # regular_score: NaN -> 0 (isinf can never trigger after sigmoid+clamp)
    scores_out_ref[...] = jnp.where(jnp.isnan(sc), jnp.zeros_like(sc), sc)


def _kpfcnn_pallas(features, params):
    vmem = pl.BlockSpec(memory_space=pltpu.MemorySpace.VMEM)
    smem = pl.BlockSpec(memory_space=pltpu.MemorySpace.SMEM)
    return pl.pallas_call(
        _kpfcnn_kernel,
        out_shape=(jax.ShapeDtypeStruct((N_F, FINAL_FEATS_DIM), jnp.float32),
                   jax.ShapeDtypeStruct((N_F, 2), jnp.float32)),
        in_specs=[vmem] * 22 + [smem, smem],
        out_specs=(vmem, vmem),
    )(features.astype(jnp.float32),
      params['enc0_w'], params['enc0_b'],
      params['enc1_w'], params['enc1_b'],
      params['bottle_w'], params['bottle_b'],
      params['gnn0_w'], params['gnn0_b'],
      params['gnn1_w'], params['gnn1_b'],
      params['proj_g_w'], params['proj_g_b'], params['proj_s_w'],
      params['dec_w_feat_f'], params['dec_w_feat_s'],
      params['dec_w_sc_f'], params['dec_w_sc_s'],
      params['dec_w_skip_f'], params['dec_w_skip_s'],
      params['dec_b_f'], params['dec_b_s'],
      params['epsilon'], params['proj_s_b'])


# ----------------------------------------------------------------------------
# Deterministic parameter init (weights pre-shaped / pre-cast: zero wrapper glue)
# ----------------------------------------------------------------------------
def _init_linear(key, cin, cout, scale=0.1):
    kw, kb = jax.random.split(key)
    w = scale * jax.random.normal(kw, (cin, cout), jnp.float32)
    b = scale * jax.random.normal(kb, (cout,), jnp.float32)
    return w, b


def init_params(key):
    f32, bf16 = jnp.float32, jnp.bfloat16
    ks = jax.random.split(key, 8)
    p = {}
    # TODO(synk): stand-ins for KPConv encoder blocks (no radius-neighbor gather).
    w, b = _init_linear(ks[0], IN_FEATS_DIM, FIRST_FEATS_DIM)
    p['enc0_w'], p['enc0_b'] = w.astype(f32), b.reshape(1, -1).astype(f32)
    w, b = _init_linear(ks[1], FIRST_FEATS_DIM, ENC_OUT_DIM)
    p['enc1_w'], p['enc1_b'] = w.astype(bf16), b.reshape(1, -1).astype(f32)
    # bottle: Conv1d(in_dim, gnn_feats_dim, 1)
    w, b = _init_linear(ks[2], ENC_OUT_DIM, GNN_FEATS_DIM)
    p['bottle_w'], p['bottle_b'] = w.astype(bf16), b.reshape(1, -1).astype(f32)
    # TODO(synk): stand-in for the DGCNN/attention GCN (per-point MLP only).
    w, b = _init_linear(ks[3], GNN_FEATS_DIM, GNN_FEATS_DIM)
    p['gnn0_w'], p['gnn0_b'] = w.astype(bf16), b.reshape(1, -1).astype(f32)
    w, b = _init_linear(ks[4], GNN_FEATS_DIM, GNN_FEATS_DIM)
    p['gnn1_w'], p['gnn1_b'] = w.astype(bf16), b.reshape(1, -1).astype(f32)
    # proj_gnn: aligned [128,128] MXU matmul.  proj_score: single channel kept
    # as a [1,128] lane row, evaluated in-kernel as a cross-lane reduction.
    w, b = _init_linear(ks[5], GNN_FEATS_DIM, GNN_FEATS_DIM)
    p['proj_g_w'], p['proj_g_b'] = w.astype(bf16), b.reshape(1, -1).astype(f32)
    w, b = _init_linear(ks[6], GNN_FEATS_DIM, 1)
    p['proj_s_w'] = w.reshape(1, -1).astype(f32)          # [1, 128]
    p['proj_s_b'] = b.reshape(1).astype(f32)              # (1,) SMEM scalar
    # TODO(synk): stand-in for KPConv decoder blocks (nearest upsample + unary).
    # Decoder input rows: [scores_c, saliency | feats_gnn_raw(128) | skip(32)];
    # output columns split lane-wise into feats(32) and scores(2).
    dec_in = 2 + GNN_FEATS_DIM + FIRST_FEATS_DIM
    w, b = _init_linear(ks[7], dec_in, DEC_OUT_DIM)
    p['dec_w_sc_f'] = w[:2, :FINAL_FEATS_DIM].astype(f32)
    p['dec_w_sc_s'] = w[:2, FINAL_FEATS_DIM:].astype(f32)
    p['dec_w_feat_f'] = w[2:2 + GNN_FEATS_DIM, :FINAL_FEATS_DIM].astype(bf16)
    p['dec_w_feat_s'] = w[2:2 + GNN_FEATS_DIM, FINAL_FEATS_DIM:].astype(bf16)
    p['dec_w_skip_f'] = w[2 + GNN_FEATS_DIM:, :FINAL_FEATS_DIM].astype(bf16)
    p['dec_w_skip_s'] = w[2 + GNN_FEATS_DIM:, FINAL_FEATS_DIM:].astype(bf16)
    p['dec_b_f'] = b[:FINAL_FEATS_DIM].reshape(1, -1).astype(f32)
    p['dec_b_s'] = b[FINAL_FEATS_DIM:].reshape(1, -1).astype(f32)
    # learnable temperature parameter epsilon (temperature = exp(eps) + 0.03)
    p['epsilon'] = jnp.full((1,), -5.0, f32)
    return p


# ----------------------------------------------------------------------------
# Forward pass (mirrors KPFCNN.forward; image_feature / node_overlap /
# quaternion branches are off, as in the default config)
# ----------------------------------------------------------------------------
def kpfcnn_forward(features, params):
    assert features.shape == (N_F, IN_FEATS_DIM)
    feats_f, scores = _kpfcnn_pallas(features, params)
    return {'feats_f': feats_f,
            'scores_overlap': scores[:, 0],
            'scores_saliency': scores[:, 1]}


# ----------------------------------------------------------------------------
if __name__ == "__main__":
    key = jax.random.PRNGKey(0)
    params = init_params(key)

    # batch['features'] in KPFCNN is a column of ones (in_feats_dim == 1)
    features = jnp.ones((N_F, IN_FEATS_DIM), jnp.float32)

    fwd = jax.jit(kpfcnn_forward)
    res = fwd(features, params)
    jax.block_until_ready(res)

    assert res['feats_f'].shape == (N_F, FINAL_FEATS_DIM)
    assert res['scores_overlap'].shape == (N_F,)
    assert res['scores_saliency'].shape == (N_F,)
    print("KERNEL_OK")
</pallas_src>

<mosaic_0001>
module attributes {stable_mosaic.version = 11 : i64} {
  func.func @_kpfcnn_kernel(%arg0: memref<64x1xf32, #tpu.memory_space<vmem>>, %arg1: memref<1x32xf32, #tpu.memory_space<vmem>>, %arg2: memref<1x32xf32, #tpu.memory_space<vmem>>, %arg3: memref<32x64xbf16, #tpu.memory_space<vmem>>, %arg4: memref<1x64xf32, #tpu.memory_space<vmem>>, %arg5: memref<64x128xbf16, #tpu.memory_space<vmem>>, %arg6: memref<1x128xf32, #tpu.memory_space<vmem>>, %arg7: memref<128x128xbf16, #tpu.memory_space<vmem>>, %arg8: memref<1x128xf32, #tpu.memory_space<vmem>>, %arg9: memref<128x128xbf16, #tpu.memory_space<vmem>>, %arg10: memref<1x128xf32, #tpu.memory_space<vmem>>, %arg11: memref<128x128xbf16, #tpu.memory_space<vmem>>, %arg12: memref<1x128xf32, #tpu.memory_space<vmem>>, %arg13: memref<1x128xf32, #tpu.memory_space<vmem>>, %arg14: memref<128x32xbf16, #tpu.memory_space<vmem>>, %arg15: memref<128x2xbf16, #tpu.memory_space<vmem>>, %arg16: memref<2x32xf32, #tpu.memory_space<vmem>>, %arg17: memref<2x2xf32, #tpu.memory_space<vmem>>, %arg18: memref<32x32xbf16, #tpu.memory_space<vmem>>, %arg19: memref<32x2xbf16, #tpu.memory_space<vmem>>, %arg20: memref<1x32xf32, #tpu.memory_space<vmem>>, %arg21: memref<1x2xf32, #tpu.memory_space<vmem>>, %arg22: memref<1xf32, #tpu.memory_space<smem>>, %arg23: memref<1xf32, #tpu.memory_space<smem>>, %arg24: memref<64x32xf32, #tpu.memory_space<vmem>>, %arg25: memref<64x2xf32, #tpu.memory_space<vmem>>) attributes {dimension_semantics = [], scalar_prefetch = 0 : i64, scratch_operands = 0 : i64, tpu.core_type = #tpu.core_type<tc>} {
    %c0 = arith.constant 0 : index
    %c0_0 = arith.constant 0 : index
    %0 = vector.load %arg0[%c0, %c0_0] : memref<64x1xf32, #tpu.memory_space<vmem>>, vector<64x1xf32>
    %c0_1 = arith.constant 0 : index
    %c0_2 = arith.constant 0 : index
    %1 = vector.load %arg1[%c0_1, %c0_2] : memref<1x32xf32, #tpu.memory_space<vmem>>, vector<1x32xf32>
    %2 = vector.broadcast %0 : vector<64x1xf32> to vector<64x32xf32>
    %3 = vector.broadcast %1 : vector<1x32xf32> to vector<64x32xf32>
    %4 = arith.mulf %2, %3 : vector<64x32xf32>
    %c0_3 = arith.constant 0 : index
    %c0_4 = arith.constant 0 : index
    %5 = vector.load %arg2[%c0_3, %c0_4] : memref<1x32xf32, #tpu.memory_space<vmem>>, vector<1x32xf32>
    %6 = vector.broadcast %5 : vector<1x32xf32> to vector<64x32xf32>
    %7 = arith.addf %4, %6 : vector<64x32xf32>
    %cst = arith.constant 0.000000e+00 : f32
    %8 = vector.broadcast %cst : f32 to vector<64x32xf32>
    %9 = arith.maximumf %7, %8 : vector<64x32xf32>
    %10 = tpu.iota {dimensions = array<i32: 0>} : vector<32x64xi32>
    %11 = tpu.iota {dimensions = array<i32: 1>} : vector<32x64xi32>
    %c2_i32 = arith.constant 2 : i32
    %12 = vector.broadcast %c2_i32 : i32 to vector<32x64xi32>
    %13 = arith.muli %12, %10 : vector<32x64xi32>
    %14 = arith.cmpi eq, %11, %13 : vector<32x64xi32>
    %15 = arith.extui %14 : vector<32x64xi1> to vector<32x64xi32>
    %16 = arith.sitofp %15 : vector<32x64xi32> to vector<32x64xf32>
    %cst_5 = arith.constant dense<0.000000e+00> : vector<32x32xf32>
    %17 = tpu.matmul %16, %9, %cst_5 {dimension_numbers = #tpu.dot_dimension_numbers<[1], [0], [0], [1], [0, 0, 1, 1], [], []>} : vector<32x64xf32>, vector<64x32xf32>, vector<32x32xf32> -> vector<32x32xf32>
    %18 = arith.truncf %17 : vector<32x32xf32> to vector<32x32xbf16>
    %c0_6 = arith.constant 0 : index
    %c0_7 = arith.constant 0 : index
    %19 = vector.load %arg3[%c0_6, %c0_7] : memref<32x64xbf16, #tpu.memory_space<vmem>>, vector<32x64xbf16>
    %cst_8 = arith.constant dense<0.000000e+00> : vector<32x64xf32>
    %20 = tpu.matmul %18, %19, %cst_8 {dimension_numbers = #tpu.dot_dimension_numbers<[1], [0], [0], [1], [0, 0, 1, 1], [], []>} : vector<32x32xbf16>, vector<32x64xbf16>, vector<32x64xf32> -> vector<32x64xf32>
    %c0_9 = arith.constant 0 : index
    %c0_10 = arith.constant 0 : index
    %21 = vector.load %arg4[%c0_9, %c0_10] : memref<1x64xf32, #tpu.memory_space<vmem>>, vector<1x64xf32>
    %22 = vector.broadcast %21 : vector<1x64xf32> to vector<32x64xf32>
    %23 = arith.addf %20, %22 : vector<32x64xf32>
    %cst_11 = arith.constant 0.000000e+00 : f32
    %24 = vector.broadcast %cst_11 : f32 to vector<32x64xf32>
    %25 = arith.maximumf %23, %24 : vector<32x64xf32>
    %26 = arith.truncf %25 : vector<32x64xf32> to vector<32x64xbf16>
    %c0_12 = arith.constant 0 : index
    %c0_13 = arith.constant 0 : index
    %27 = vector.load %arg5[%c0_12, %c0_13] : memref<64x128xbf16, #tpu.memory_space<vmem>>, vector<64x128xbf16>
    %cst_14 = arith.constant dense<0.000000e+00> : vector<32x128xf32>
    %28 = tpu.matmul %26, %27, %cst_14 {dimension_numbers = #tpu.dot_dimension_numbers<[1], [0], [0], [1], [0, 0, 1, 1], [], []>} : vector<32x64xbf16>, vector<64x128xbf16>, vector<32x128xf32> -> vector<32x128xf32>
    %c0_15 = arith.constant 0 : index
    %c0_16 = arith.constant 0 : index
    %29 = vector.load %arg6[%c0_15, %c0_16] : memref<1x128xf32, #tpu.memory_space<vmem>>, vector<1x128xf32>
    %30 = vector.broadcast %29 : vector<1x128xf32> to vector<32x128xf32>
    %31 = arith.addf %28, %30 : vector<32x128xf32>
    %32 = arith.truncf %31 : vector<32x128xf32> to vector<32x128xbf16>
    %c0_17 = arith.constant 0 : index
    %c0_18 = arith.constant 0 : index
    %33 = vector.load %arg7[%c0_17, %c0_18] : memref<128x128xbf16, #tpu.memory_space<vmem>>, vector<128x128xbf16>
    %cst_19 = arith.constant dense<0.000000e+00> : vector<32x128xf32>
    %34 = tpu.matmul %32, %33, %cst_19 {dimension_numbers = #tpu.dot_dimension_numbers<[1], [0], [0], [1], [0, 0, 1, 1], [], []>} : vector<32x128xbf16>, vector<128x128xbf16>, vector<32x128xf32> -> vector<32x128xf32>
    %c0_20 = arith.constant 0 : index
    %c0_21 = arith.constant 0 : index
    %35 = vector.load %arg8[%c0_20, %c0_21] : memref<1x128xf32, #tpu.memory_space<vmem>>, vector<1x128xf32>
    %36 = vector.broadcast %35 : vector<1x128xf32> to vector<32x128xf32>
    %37 = arith.addf %34, %36 : vector<32x128xf32>
    %cst_22 = arith.constant 0.000000e+00 : f32
    %38 = vector.broadcast %cst_22 : f32 to vector<32x128xf32>
    %39 = arith.maximumf %37, %38 : vector<32x128xf32>
    %40 = arith.truncf %39 : vector<32x128xf32> to vector<32x128xbf16>
    %c0_23 = arith.constant 0 : index
    %c0_24 = arith.constant 0 : index
    %41 = vector.load %arg9[%c0_23, %c0_24] : memref<128x128xbf16, #tpu.memory_space<vmem>>, vector<128x128xbf16>
    %cst_25 = arith.constant dense<0.000000e+00> : vector<32x128xf32>
    %42 = tpu.matmul %40, %41, %cst_25 {dimension_numbers = #tpu.dot_dimension_numbers<[1], [0], [0], [1], [0, 0, 1, 1], [], []>} : vector<32x128xbf16>, vector<128x128xbf16>, vector<32x128xf32> -> vector<32x128xf32>
    %c0_26 = arith.constant 0 : index
    %c0_27 = arith.constant 0 : index
    %43 = vector.load %arg10[%c0_26, %c0_27] : memref<1x128xf32, #tpu.memory_space<vmem>>, vector<1x128xf32>
    %44 = vector.broadcast %43 : vector<1x128xf32> to vector<32x128xf32>
    %45 = arith.addf %42, %44 : vector<32x128xf32>
    %46 = arith.truncf %45 : vector<32x128xf32> to vector<32x128xbf16>
    %c0_28 = arith.constant 0 : index
    %c0_29 = arith.constant 0 : index
    %47 = vector.load %arg11[%c0_28, %c0_29] : memref<128x128xbf16, #tpu.memory_space<vmem>>, vector<128x128xbf16>
    %cst_30 = arith.constant dense<0.000000e+00> : vector<32x128xf32>
    %48 = tpu.matmul %46, %47, %cst_30 {dimension_numbers = #tpu.dot_dimension_numbers<[1], [0], [0], [1], [0, 0, 1, 1], [], []>} : vector<32x128xbf16>, vector<128x128xbf16>, vector<32x128xf32> -> vector<32x128xf32>
    %c0_31 = arith.constant 0 : index
    %c0_32 = arith.constant 0 : index
    %49 = vector.load %arg12[%c0_31, %c0_32] : memref<1x128xf32, #tpu.memory_space<vmem>>, vector<1x128xf32>
    %50 = vector.broadcast %49 : vector<1x128xf32> to vector<32x128xf32>
    %51 = arith.addf %48, %50 : vector<32x128xf32>
    %c0_33 = arith.constant 0 : index
    %c0_34 = arith.constant 0 : index
    %52 = vector.load %arg13[%c0_33, %c0_34] : memref<1x128xf32, #tpu.memory_space<vmem>>, vector<1x128xf32>
    %53 = vector.broadcast %52 : vector<1x128xf32> to vector<32x128xf32>
    %54 = arith.mulf %51, %53 : vector<32x128xf32>
    %cst_35 = arith.constant dense<0.000000e+00> : vector<32xf32>
    %55 = vector.multi_reduction <add>, %54, %cst_35 [1] : vector<32x128xf32> to vector<32xf32>
    %56 = vector.shape_cast %55 : vector<32xf32> to vector<32x1xf32>
    %c0_36 = arith.constant 0 : index
    %57 = memref.load %arg23[%c0_36] : memref<1xf32, #tpu.memory_space<smem>>
    %58 = vector.broadcast %57 : f32 to vector<32x1xf32>
    %59 = arith.addf %56, %58 : vector<32x1xf32>
    %60 = arith.mulf %51, %51 : vector<32x128xf32>
    %cst_37 = arith.constant dense<0.000000e+00> : vector<32xf32>
    %61 = vector.multi_reduction <add>, %60, %cst_37 [1] : vector<32x128xf32> to vector<32xf32>
    %62 = vector.shape_cast %61 : vector<32xf32> to vector<32x1xf32>
    %cst_38 = arith.constant 1.000000e-24 : f32
    %63 = vector.broadcast %cst_38 : f32 to vector<32x1xf32>
    %64 = arith.maximumf %62, %63 : vector<32x1xf32>
    %65 = math.rsqrt %64 : vector<32x1xf32>
    %66 = vector.broadcast %65 : vector<32x1xf32> to vector<32x128xf32>
    %67 = arith.mulf %51, %66 : vector<32x128xf32>
    %c0_39 = arith.constant 0 : index
    %68 = memref.load %arg22[%c0_39] : memref<1xf32, #tpu.memory_space<smem>>
    %69 = vector.broadcast %68 : f32 to vector<1x1xf32>
    %70 = math.exp %69 : vector<1x1xf32>
    %cst_40 = arith.constant 3.000000e-02 : f32
    %71 = vector.broadcast %cst_40 : f32 to vector<1x1xf32>
    %72 = arith.addf %70, %71 : vector<1x1xf32>
    %cst_41 = arith.constant 1.000000e+00 : f32
    %73 = vector.broadcast %cst_41 : f32 to vector<1x1xf32>
    %74 = arith.divf %73, %72 : vector<1x1xf32>
    %75 = vector.extract_strided_slice %67 {offsets = [0, 0], sizes = [16, 128], strides = [1, 1]} : vector<32x128xf32> to vector<16x128xf32>
    %76 = vector.extract_strided_slice %67 {offsets = [16, 0], sizes = [16, 128], strides = [1, 1]} : vector<32x128xf32> to vector<16x128xf32>
    %77 = vector.extract_strided_slice %59 {offsets = [0, 0], sizes = [16, 1], strides = [1, 1]} : vector<32x1xf32> to vector<16x1xf32>
    %78 = vector.extract_strided_slice %59 {offsets = [16, 0], sizes = [16, 1], strides = [1, 1]} : vector<32x1xf32> to vector<16x1xf32>
    %cst_42 = arith.constant dense<0.000000e+00> : vector<16x16xf32>
    %79 = tpu.matmul %75, %76, %cst_42 {dimension_numbers = #tpu.dot_dimension_numbers<[1], [1], [0], [0], [0, 0, 1, 0], [], []>} : vector<16x128xf32>, vector<16x128xf32>, vector<16x16xf32> -> vector<16x16xf32>
    %80 = vector.broadcast %74 : vector<1x1xf32> to vector<16x16xf32>
    %81 = arith.mulf %79, %80 : vector<16x16xf32>
    %cst_43 = arith.constant dense<0xFF800000> : vector<16xf32>
    %82 = vector.multi_reduction <maximumf>, %81, %cst_43 [1] : vector<16x16xf32> to vector<16xf32>
    %83 = vector.shape_cast %82 : vector<16xf32> to vector<16x1xf32>
    %84 = vector.broadcast %83 : vector<16x1xf32> to vector<16x16xf32>
    %85 = arith.subf %81, %84 : vector<16x16xf32>
    %86 = math.exp %85 : vector<16x16xf32>
    %cst_44 = arith.constant dense<0.000000e+00> : vector<16xf32>
    %87 = vector.multi_reduction <add>, %86, %cst_44 [1] : vector<16x16xf32> to vector<16xf32>
    %88 = vector.shape_cast %87 : vector<16xf32> to vector<16x1xf32>
    %89 = tpu.reciprocal %88 {approx = true} : vector<16x1xf32> -> vector<16x1xf32>
    %90 = vector.broadcast %89 : vector<16x1xf32> to vector<16x16xf32>
    %91 = arith.mulf %86, %90 : vector<16x16xf32>
    %cst_45 = arith.constant dense<0.000000e+00> : vector<16x1xf32>
    %92 = tpu.matmul %91, %78, %cst_45 {dimension_numbers = #tpu.dot_dimension_numbers<[1], [0], [0], [1], [0, 0, 1, 1], [], []>} : vector<16x16xf32>, vector<16x1xf32>, vector<16x1xf32> -> vector<16x1xf32>
    %cst_46 = arith.constant dense<0xFF800000> : vector<16xf32>
    %93 = vector.multi_reduction <maximumf>, %81, %cst_46 [0] : vector<16x16xf32> to vector<16xf32>
    %94 = vector.shape_cast %93 : vector<16xf32> to vector<1x16xf32>
    %95 = vector.broadcast %94 : vector<1x16xf32> to vector<16x16xf32>
    %96 = arith.subf %81, %95 : vector<16x16xf32>
    %97 = math.exp %96 : vector<16x16xf32>
    %cst_47 = arith.constant dense<0.000000e+00> : vector<16xf32>
    %98 = vector.multi_reduction <add>, %97, %cst_47 [0] : vector<16x16xf32> to vector<16xf32>
    %99 = vector.shape_cast %98 : vector<16xf32> to vector<1x16xf32>
    %100 = tpu.reciprocal %99 {approx = true} : vector<1x16xf32> -> vector<1x16xf32>
    %101 = vector.broadcast %100 : vector<1x16xf32> to vector<16x16xf32>
    %102 = arith.mulf %97, %101 : vector<16x16xf32>
    %cst_48 = arith.constant dense<0.000000e+00> : vector<16x1xf32>
    %103 = tpu.matmul %102, %77, %cst_48 {dimension_numbers = #tpu.dot_dimension_numbers<[0], [0], [1], [1], [0, 1, 1, 1], [], []>} : vector<16x16xf32>, vector<16x1xf32>, vector<16x1xf32> -> vector<16x1xf32>
    %104 = tpu.concatenate %92, %103 in 0 : vector<16x1xf32>, vector<16x1xf32> -> vector<32x1xf32>
    %c0_49 = arith.constant 0 : index
    %c0_50 = arith.constant 0 : index
    %105 = vector.load %arg16[%c0_49, %c0_50] : memref<2x32xf32, #tpu.memory_space<vmem>>, vector<2x32xf32>
    %c0_51 = arith.constant 0 : index
    %c0_52 = arith.constant 0 : index
    %106 = vector.load %arg17[%c0_51, %c0_52] : memref<2x2xf32, #tpu.memory_space<vmem>>, vector<2x2xf32>
    %107 = arith.truncf %51 : vector<32x128xf32> to vector<32x128xbf16>
    %c0_53 = arith.constant 0 : index
    %c0_54 = arith.constant 0 : index
    %108 = vector.load %arg14[%c0_53, %c0_54] : memref<128x32xbf16, #tpu.memory_space<vmem>>, vector<128x32xbf16>
    %cst_55 = arith.constant dense<0.000000e+00> : vector<32x32xf32>
    %109 = tpu.matmul %107, %108, %cst_55 {dimension_numbers = #tpu.dot_dimension_numbers<[1], [0], [0], [1], [0, 0, 1, 1], [], []>} : vector<32x128xbf16>, vector<128x32xbf16>, vector<32x32xf32> -> vector<32x32xf32>
    %110 = vector.extract_strided_slice %105 {offsets = [0, 0], sizes = [1, 32], strides = [1, 1]} : vector<2x32xf32> to vector<1x32xf32>
    %111 = vector.broadcast %59 : vector<32x1xf32> to vector<32x32xf32>
    %112 = vector.broadcast %110 : vector<1x32xf32> to vector<32x32xf32>
    %113 = arith.mulf %111, %112 : vector<32x32xf32>
    %114 = arith.addf %109, %113 : vector<32x32xf32>
    %115 = vector.extract_strided_slice %105 {offsets = [1, 0], sizes = [1, 32], strides = [1, 1]} : vector<2x32xf32> to vector<1x32xf32>
    %116 = vector.broadcast %104 : vector<32x1xf32> to vector<32x32xf32>
    %117 = vector.broadcast %115 : vector<1x32xf32> to vector<32x32xf32>
    %118 = arith.mulf %116, %117 : vector<32x32xf32>
    %119 = arith.addf %114, %118 : vector<32x32xf32>
    %120 = arith.truncf %51 : vector<32x128xf32> to vector<32x128xbf16>
    %c0_56 = arith.constant 0 : index
    %c0_57 = arith.constant 0 : index
    %121 = vector.load %arg15[%c0_56, %c0_57] : memref<128x2xbf16, #tpu.memory_space<vmem>>, vector<128x2xbf16>
    %cst_58 = arith.constant dense<0.000000e+00> : vector<32x2xf32>
    %122 = tpu.matmul %120, %121, %cst_58 {dimension_numbers = #tpu.dot_dimension_numbers<[1], [0], [0], [1], [0, 0, 1, 1], [], []>} : vector<32x128xbf16>, vector<128x2xbf16>, vector<32x2xf32> -> vector<32x2xf32>
    %123 = vector.extract_strided_slice %106 {offsets = [0, 0], sizes = [1, 2], strides = [1, 1]} : vector<2x2xf32> to vector<1x2xf32>
    %124 = vector.broadcast %59 : vector<32x1xf32> to vector<32x2xf32>
    %125 = vector.broadcast %123 : vector<1x2xf32> to vector<32x2xf32>
    %126 = arith.mulf %124, %125 : vector<32x2xf32>
    %127 = arith.addf %122, %126 : vector<32x2xf32>
    %128 = vector.extract_strided_slice %106 {offsets = [1, 0], sizes = [1, 2], strides = [1, 1]} : vector<2x2xf32> to vector<1x2xf32>
    %129 = vector.broadcast %104 : vector<32x1xf32> to vector<32x2xf32>
    %130 = vector.broadcast %128 : vector<1x2xf32> to vector<32x2xf32>
    %131 = arith.mulf %129, %130 : vector<32x2xf32>
    %132 = arith.addf %127, %131 : vector<32x2xf32>
    %133 = tpu.iota {dimensions = array<i32: 0>} : vector<64x32xi32>
    %134 = tpu.iota {dimensions = array<i32: 1>} : vector<64x32xi32>
    %c2_i32_59 = arith.constant 2 : i32
    %135 = vector.broadcast %c2_i32_59 : i32 to vector<64x32xi32>
    %136 = arith.muli %135, %134 : vector<64x32xi32>
    %137 = arith.subi %133, %136 : vector<64x32xi32>
    %c0_i32 = arith.constant 0 : i32
    %138 = vector.broadcast %c0_i32 : i32 to vector<64x32xi32>
    %139 = arith.cmpi eq, %137, %138 : vector<64x32xi32>
    %c1_i32 = arith.constant 1 : i32
    %140 = vector.broadcast %c1_i32 : i32 to vector<64x32xi32>
    %141 = arith.cmpi eq, %137, %140 : vector<64x32xi32>
    %142 = arith.ori %139, %141 : vector<64x32xi1>
    %143 = arith.extui %142 : vector<64x32xi1> to vector<64x32xi32>
    %144 = arith.sitofp %143 : vector<64x32xi32> to vector<64x32xf32>
    %cst_60 = arith.constant dense<0.000000e+00> : vector<64x32xf32>
    %145 = tpu.matmul %144, %119, %cst_60 {dimension_numbers = #tpu.dot_dimension_numbers<[1], [0], [0], [1], [0, 0, 1, 1], [], []>} : vector<64x32xf32>, vector<32x32xf32>, vector<64x32xf32> -> vector<64x32xf32>
    %146 = arith.truncf %9 : vector<64x32xf32> to vector<64x32xbf16>
    %c0_61 = arith.constant 0 : index
    %c0_62 = arith.constant 0 : index
    %147 = vector.load %arg18[%c0_61, %c0_62] : memref<32x32xbf16, #tpu.memory_space<vmem>>, vector<32x32xbf16>
    %cst_63 = arith.constant dense<0.000000e+00> : vector<64x32xf32>
    %148 = tpu.matmul %146, %147, %cst_63 {dimension_numbers = #tpu.dot_dimension_numbers<[1], [0], [0], [1], [0, 0, 1, 1], [], []>} : vector<64x32xbf16>, vector<32x32xbf16>, vector<64x32xf32> -> vector<64x32xf32>
    %149 = arith.addf %145, %148 : vector<64x32xf32>
    %c0_64 = arith.constant 0 : index
    %c0_65 = arith.constant 0 : index
    %150 = vector.load %arg20[%c0_64, %c0_65] : memref<1x32xf32, #tpu.memory_space<vmem>>, vector<1x32xf32>
    %151 = vector.broadcast %150 : vector<1x32xf32> to vector<64x32xf32>
    %152 = arith.addf %149, %151 : vector<64x32xf32>
    %cst_66 = arith.constant dense<0.000000e+00> : vector<64x2xf32>
    %153 = tpu.matmul %144, %132, %cst_66 {dimension_numbers = #tpu.dot_dimension_numbers<[1], [0], [0], [1], [0, 0, 1, 1], [], []>} : vector<64x32xf32>, vector<32x2xf32>, vector<64x2xf32> -> vector<64x2xf32>
    %154 = arith.truncf %9 : vector<64x32xf32> to vector<64x32xbf16>
    %c0_67 = arith.constant 0 : index
    %c0_68 = arith.constant 0 : index
    %155 = vector.load %arg19[%c0_67, %c0_68] : memref<32x2xbf16, #tpu.memory_space<vmem>>, vector<32x2xbf16>
    %cst_69 = arith.constant dense<0.000000e+00> : vector<64x2xf32>
    %156 = tpu.matmul %154, %155, %cst_69 {dimension_numbers = #tpu.dot_dimension_numbers<[1], [0], [0], [1], [0, 0, 1, 1], [], []>} : vector<64x32xbf16>, vector<32x2xbf16>, vector<64x2xf32> -> vector<64x2xf32>
    %157 = arith.addf %153, %156 : vector<64x2xf32>
    %c0_70 = arith.constant 0 : index
    %c0_71 = arith.constant 0 : index
    %158 = vector.load %arg21[%c0_70, %c0_71] : memref<1x2xf32, #tpu.memory_space<vmem>>, vector<1x2xf32>
    %159 = vector.broadcast %158 : vector<1x2xf32> to vector<64x2xf32>
    %160 = arith.addf %157, %159 : vector<64x2xf32>
    %161 = arith.mulf %152, %152 : vector<64x32xf32>
    %cst_72 = arith.constant dense<0.000000e+00> : vector<64xf32>
    %162 = vector.multi_reduction <add>, %161, %cst_72 [1] : vector<64x32xf32> to vector<64xf32>
    %163 = vector.shape_cast %162 : vector<64xf32> to vector<64x1xf32>
    %cst_73 = arith.constant 1.000000e-24 : f32
    %164 = vector.broadcast %cst_73 : f32 to vector<64x1xf32>
    %165 = arith.maximumf %163, %164 : vector<64x1xf32>
    %166 = math.rsqrt %165 : vector<64x1xf32>
    %167 = vector.broadcast %166 : vector<64x1xf32> to vector<64x32xf32>
    %168 = arith.mulf %152, %167 : vector<64x32xf32>
    %c0_74 = arith.constant 0 : index
    %c0_75 = arith.constant 0 : index
    %169 = vector.load %arg24[%c0_74, %c0_75] : memref<64x32xf32, #tpu.memory_space<vmem>>, vector<64x32xf32>
    tpu.vector_store %arg24[%c0_74, %c0_75], %168 {strides = array<i32>} : memref<64x32xf32, #tpu.memory_space<vmem>>, vector<64x32xf32>,
    %170 = arith.negf %160 : vector<64x2xf32>
    %171 = math.exp %170 : vector<64x2xf32>
    %cst_76 = arith.constant 1.000000e+00 : f32
    %172 = vector.broadcast %cst_76 : f32 to vector<64x2xf32>
    %173 = arith.addf %172, %171 : vector<64x2xf32>
    %174 = arith.divf %172, %173 : vector<64x2xf32>
    %cst_77 = arith.constant 0.000000e+00 : f32
    %cst_78 = arith.constant 1.000000e+00 : f32
    %175 = vector.broadcast %cst_77 : f32 to vector<64x2xf32>
    %176 = arith.maximumf %175, %174 : vector<64x2xf32>
    %177 = vector.broadcast %cst_78 : f32 to vector<64x2xf32>
    %178 = arith.minimumf %177, %176 : vector<64x2xf32>
    %179 = arith.cmpf one, %178, %178 : vector<64x2xf32>
    %cst_79 = arith.constant 0.000000e+00 : f32
    %180 = vector.broadcast %cst_79 : f32 to vector<64x2xf32>
    %181 = arith.select %179, %180, %178 : vector<64x2xi1>, vector<64x2xf32>
    %c0_80 = arith.constant 0 : index
    %c0_81 = arith.constant 0 : index
    %182 = vector.load %arg25[%c0_80, %c0_81] : memref<64x2xf32, #tpu.memory_space<vmem>>, vector<64x2xf32>
    tpu.vector_store %arg25[%c0_80, %c0_81], %181 {strides = array<i32>} : memref<64x2xf32, #tpu.memory_space<vmem>>, vector<64x2xf32>,
    return
  }
}

</mosaic_0001>

<llo_original>
// kernel: kpfcnn_forward.1
$region0: #{kpfcnn_forward.1}
  #allocation0 [shape = 'u32[]', space=smem, size = 0x4, offset = 0x4, fixed_abs, tag = 'smem constant byte address 0x4 - core index']
  #allocation1 [shape = 'u32[72,128]{1,0:T(1,128)}', space=vmem, size = 0x9000, scoped, tag = 'internal scratch']
  #allocation2 [shape = 'f32[1]{0:T(128)S(6)}', space=smem, size = 0x200, scoped, tag = 'scoped memory for kpfcnn_forward.1']
  #allocation3 [shape = 'f32[1]{0:T(128)S(6)}', space=smem, size = 0x200, scoped, tag = 'scoped memory for kpfcnn_forward.1']
  %s0 = inlined_call_operand.vmem [shape: f32[64,1], index: 0, kind: input, shape index: {}]
  %s1 = inlined_call_operand.vmem [shape: f32[1,32], index: 1, kind: input, shape index: {}]
  %s2 = inlined_call_operand.vmem [shape: f32[1,32], index: 2, kind: input, shape index: {}]
  %s3 = inlined_call_operand.vmem [shape: bf16[32,64], index: 3, kind: input, shape index: {}]
  %s4 = inlined_call_operand.vmem [shape: f32[1,64], index: 4, kind: input, shape index: {}]
  %s5 = inlined_call_operand.hbm [shape: bf16[64,128], index: 5, kind: input, shape index: {}]
  %s6 = inlined_call_operand.hbm [shape: f32[1,128], index: 6, kind: input, shape index: {}]
  %s7 = inlined_call_operand.vmem [shape: bf16[128,128], index: 7, kind: input, shape index: {}]
  %s8 = inlined_call_operand.vmem [shape: f32[1,128], index: 8, kind: input, shape index: {}]
  %s9 = inlined_call_operand.vmem [shape: bf16[128,128], index: 9, kind: input, shape index: {}]
  %s10 = inlined_call_operand.vmem [shape: f32[1,128], index: 10, kind: input, shape index: {}]
  %s11 = inlined_call_operand.vmem [shape: bf16[128,128], index: 11, kind: input, shape index: {}]
  %s12 = inlined_call_operand.vmem [shape: f32[1,128], index: 12, kind: input, shape index: {}]
  %s13 = inlined_call_operand.vmem [shape: f32[1,128], index: 13, kind: input, shape index: {}]
  %s14 = inlined_call_operand.vmem [shape: bf16[128,32], index: 14, kind: input, shape index: {}]
  %s15 = inlined_call_operand.vmem [shape: bf16[128,2], index: 15, kind: input, shape index: {}]
  %s16 = inlined_call_operand.vmem [shape: f32[2,32], index: 16, kind: input, shape index: {}]
  %s17 = inlined_call_operand.vmem [shape: f32[2,2], index: 17, kind: input, shape index: {}]
  %s18 = inlined_call_operand.hbm [shape: bf16[32,32], index: 18, kind: input, shape index: {}]
  %s19 = inlined_call_operand.vmem [shape: bf16[32,2], index: 19, kind: input, shape index: {}]
  %s20 = inlined_call_operand.hbm [shape: f32[1,32], index: 20, kind: input, shape index: {}]
  %s21 = inlined_call_operand.hbm [shape: f32[1,2], index: 21, kind: input, shape index: {}]
  %s22 = inlined_call_operand.<no memory space> [shape: f32[1], index: 22, kind: input, shape index: {}]
  %s23 = inlined_call_operand.<no memory space> [shape: f32[1], index: 23, kind: input, shape index: {}]
  %s24 = inlined_call_operand.vmem [shape: f32[64,32], index: 24, kind: output, shape index: {0}]
  %s25 = inlined_call_operand.vmem [shape: f32[64,2], index: 25, kind: output, shape index: {1}]
  %26 = xla_tuple %s24, %s25
  %s27 = sld [smem:[#allocation0]]
  $region134: #{kpfcnn_forward.1} parent=0
    _
  %s29 = ssub.s32 1, %s27
  %s30 = scalar_select 0, %s29, %s27
  %31 = sst [smem:[#allocation2]] %s22
  %32 = sst [smem:[#allocation3]] %s23
  $region1: #{kpfcnn_forward.1} parent=0
    #allocation4 [shape = 'u8[16384]{0}', space=vmem, size = 0x4000, scoped, tag = 'input window, operand 5, single buffered']
    #allocation5 [shape = 's32[1]{0}', space=sflag, size = 0x4, scoped, tag = 'scoped memory for kpfcnn_forward.1']
    #allocation6 [shape = 'u8[512]{0}', space=vmem, size = 0x400, scoped, tag = 'input window, operand 6, single buffered']
    #allocation7 [shape = 's32[1]{0}', space=sflag, size = 0x4, scoped, tag = 'scoped memory for kpfcnn_forward.1']
    #allocation8 [shape = 'u8[8192]{0}', space=vmem, size = 0x2000, scoped, tag = 'input window, operand 18, single buffered']
    #allocation9 [shape = 'u8[512]{0}', space=vmem, size = 0x400, scoped, tag = 'input window, operand 20, single buffered']
    #allocation10 [shape = 's32[1]{0}', space=sflag, size = 0x4, scoped, tag = 'scoped memory for kpfcnn_forward.1']
    #allocation11 [shape = 'u8[512]{0}', space=vmem, size = 0x400, scoped, tag = 'input window, operand 21, single buffered']
    %33 = vsyncpa [#allocation5], 0
    %34 = vsyncpa [#allocation7], 0
    %35 = vsyncpa [#allocation10], 0
    // Predicated region
    $region2: #{kpfcnn_forward.1} parent=1 // pred_check
      _
    $region3: #{kpfcnn_forward.1} parent=1 // pred_check_branch
      %37 = sbr.rel (0) target = $region5
    $region4: #{kpfcnn_forward.1} parent=1 // pred_region
      _
    $region5: #{kpfcnn_forward.1} parent=1 // pred_fallthru
      _
    // Predicated region
    $region6: #{kpfcnn_forward.1} parent=1 // pred_check
      _
    $region7: #{kpfcnn_forward.1} parent=1 // pred_check_branch
      %39 = sbr.rel (0) target = $region9
    $region8: #{kpfcnn_forward.1} parent=1 // pred_region
      _
    $region9: #{kpfcnn_forward.1} parent=1 // pred_fallthru
      _
    // Predicated region
    $region10: #{kpfcnn_forward.1} parent=1 // pred_check
      _
    $region11: #{kpfcnn_forward.1} parent=1 // pred_check_branch
      %41 = sbr.rel (0) target = $region13
    $region12: #{kpfcnn_forward.1} parent=1 // pred_region
      _
    $region13: #{kpfcnn_forward.1} parent=1 // pred_fallthru
      _
    // Predicated region
    $region14: #{kpfcnn_forward.1} parent=1 // pred_check
      _
    $region15: #{kpfcnn_forward.1} parent=1 // pred_check_branch
      %43 = sbr.rel (0) target = $region17
    $region16: #{kpfcnn_forward.1} parent=1 // pred_region
      _
    $region17: #{kpfcnn_forward.1} parent=1 // pred_fallthru
      _
    // Predicated region
    $region18: #{kpfcnn_forward.1} parent=1 // pred_check
      _
    $region19: #{kpfcnn_forward.1} parent=1 // pred_check_branch
      %45 = sbr.rel (0) target = $region21
    $region20: #{kpfcnn_forward.1} parent=1 // pred_region
      _
    $region21: #{kpfcnn_forward.1} parent=1 // pred_fallthru
      _
    // Predicated region
    $region22: #{kpfcnn_forward.1} parent=1 // pred_check
      _
    $region23: #{kpfcnn_forward.1} parent=1 // pred_check_branch
      %47 = sbr.rel (0) target = $region25
    $region24: #{kpfcnn_forward.1} parent=1 // pred_region
      %49 = vsyncadd [#allocation5], 0
      %s50 = sshll.u32 %s5, 4
      %s51 = int_to_ptr.hbm [resolvable:$true] %s50
      %s52 = sshll.u32 [#allocation4], 4
      %s53 = int_to_ptr.vmem [resolvable:$true] %s52
      %58 = dma.hbm_to_vmem [thread:$0]  %s51, 512, %s53, [#allocation5], 64, 64, 4
    $region25: #{kpfcnn_forward.1} parent=1 // pred_fallthru
      _
    // Predicated region
    $region26: #{kpfcnn_forward.1} parent=1 // pred_check
      _
    $region27: #{kpfcnn_forward.1} parent=1 // pred_check_branch
      %60 = sbr.rel (0) target = $region29
    $region28: #{kpfcnn_forward.1} parent=1 // pred_region
      %62 = vsyncadd [#allocation7], 0
      %s64 = sshll.u32 %s6, 4
      %s65 = int_to_ptr.hbm [resolvable:$true] %s64
      %s66 = sshll.u32 [#allocation6], 4
      %s67 = int_to_ptr.vmem [resolvable:$true] %s66
      %69 = dma.hbm_to_vmem [thread:$0]  %s65, 16, %s67, [#allocation7]
    $region29: #{kpfcnn_forward.1} parent=1 // pred_fallthru
      _
    // Predicated region
    $region30: #{kpfcnn_forward.1} parent=1 // pred_check
      _
    $region31: #{kpfcnn_forward.1} parent=1 // pred_check_branch
      %71 = sbr.rel (0) target = $region33
    $region32: #{kpfcnn_forward.1} parent=1 // pred_region
      _
    $region33: #{kpfcnn_forward.1} parent=1 // pred_fallthru
      _
    // Predicated region
    $region34: #{kpfcnn_forward.1} parent=1 // pred_check
      _
    $region35: #{kpfcnn_forward.1} parent=1 // pred_check_branch
      %73 = sbr.rel (0) target = $region37
    $region36: #{kpfcnn_forward.1} parent=1 // pred_region
      _
    $region37: #{kpfcnn_forward.1} parent=1 // pred_fallthru
      _
    // Predicated region
    $region38: #{kpfcnn_forward.1} parent=1 // pred_check
      _
    $region39: #{kpfcnn_forward.1} parent=1 // pred_check_branch
      %75 = sbr.rel (0) target = $region41
    $region40: #{kpfcnn_forward.1} parent=1 // pred_region
      _
    $region41: #{kpfcnn_forward.1} parent=1 // pred_fallthru
      _
    // Predicated region
    $region42: #{kpfcnn_forward.1} parent=1 // pred_check
      _
    $region43: #{kpfcnn_forward.1} parent=1 // pred_check_branch
      %77 = sbr.rel (0) target = $region45
    $region44: #{kpfcnn_forward.1} parent=1 // pred_region
      _
    $region45: #{kpfcnn_forward.1} parent=1 // pred_fallthru
      _
    // Predicated region
    $region46: #{kpfcnn_forward.1} parent=1 // pred_check
      _
    $region47: #{kpfcnn_forward.1} parent=1 // pred_check_branch
      %79 = sbr.rel (0) target = $region49
    $region48: #{kpfcnn_forward.1} parent=1 // pred_region
      _
    $region49: #{kpfcnn_forward.1} parent=1 // pred_fallthru
      _
    // Predicated region
    $region50: #{kpfcnn_forward.1} parent=1 // pred_check
      _
    $region51: #{kpfcnn_forward.1} parent=1 // pred_check_branch
      %81 = sbr.rel (0) target = $region53
    $region52: #{kpfcnn_forward.1} parent=1 // pred_region
      _
    $region53: #{kpfcnn_forward.1} parent=1 // pred_fallthru
      _
    // Predicated region
    $region54: #{kpfcnn_forward.1} parent=1 // pred_check
      _
    $region55: #{kpfcnn_forward.1} parent=1 // pred_check_branch
      %83 = sbr.rel (0) target = $region57
    $region56: #{kpfcnn_forward.1} parent=1 // pred_region
      _
    $region57: #{kpfcnn_forward.1} parent=1 // pred_fallthru
      _
    // Predicated region
    $region58: #{kpfcnn_forward.1} parent=1 // pred_check
      _
    $region59: #{kpfcnn_forward.1} parent=1 // pred_check_branch
      %85 = sbr.rel (0) target = $region61
    $region60: #{kpfcnn_forward.1} parent=1 // pred_region
      _
    $region61: #{kpfcnn_forward.1} parent=1 // pred_fallthru
      _
    // Predicated region
    $region62: #{kpfcnn_forward.1} parent=1 // pred_check
      _
    $region63: #{kpfcnn_forward.1} parent=1 // pred_check_branch
      %87 = sbr.rel (0) target = $region65
    $region64: #{kpfcnn_forward.1} parent=1 // pred_region
      _
    $region65: #{kpfcnn_forward.1} parent=1 // pred_fallthru
      _
    // Predicated region
    $region66: #{kpfcnn_forward.1} parent=1 // pred_check
      _
    $region67: #{kpfcnn_forward.1} parent=1 // pred_check_branch
      %89 = sbr.rel (0) target = $region69
    $region68: #{kpfcnn_forward.1} parent=1 // pred_region
      _
    $region69: #{kpfcnn_forward.1} parent=1 // pred_fallthru
      _
    // Predicated region
    $region70: #{kpfcnn_forward.1} parent=1 // pred_check
      _
    $region71: #{kpfcnn_forward.1} parent=1 // pred_check_branch
      %91 = sbr.rel (0) target = $region73
    $region72: #{kpfcnn_forward.1} parent=1 // pred_region
      _
    $region73: #{kpfcnn_forward.1} parent=1 // pred_fallthru
      _
    // Predicated region
    $region74: #{kpfcnn_forward.1} parent=1 // pred_check
      _
    $region75: #{kpfcnn_forward.1} parent=1 // pred_check_branch
      %93 = sbr.rel (0) target = $region77
    $region76: #{kpfcnn_forward.1} parent=1 // pred_region
      %95 = vsyncadd [#allocation7], 0
      %s96 = sshll.u32 %s18, 4
      %s97 = int_to_ptr.hbm [resolvable:$true] %s96
      %s98 = sshll.u32 [#allocation8], 4
      %s99 = int_to_ptr.vmem [resolvable:$true] %s98
      %104 = dma.hbm_to_vmem [thread:$0]  %s97, 256, %s99, [#allocation7], 64, 64, 4
    $region77: #{kpfcnn_forward.1} parent=1 // pred_fallthru
      _
    // Predicated region
    $region78: #{kpfcnn_forward.1} parent=1 // pred_check
      _
    $region79: #{kpfcnn_forward.1} parent=1 // pred_check_branch
      %106 = sbr.rel (0) target = $region81
    $region80: #{kpfcnn_forward.1} parent=1 // pred_region
      _
    $region81: #{kpfcnn_forward.1} parent=1 // pred_fallthru
      _
    // Predicated region
    $region82: #{kpfcnn_forward.1} parent=1 // pred_check
      _
    $region83: #{kpfcnn_forward.1} parent=1 // pred_check_branch
      %108 = sbr.rel (0) target = $region85
    $region84: #{kpfcnn_forward.1} parent=1 // pred_region
      %110 = vsyncadd [#allocation10], 0
      %s112 = sshll.u32 %s20, 4
      %s113 = int_to_ptr.hbm [resolvable:$true] %s112
      %s114 = sshll.u32 [#allocation9], 4
      %s115 = int_to_ptr.vmem [resolvable:$true] %s114
      %117 = dma.hbm_to_vmem [thread:$0]  %s113, 16, %s115, [#allocation10]
    $region85: #{kpfcnn_forward.1} parent=1 // pred_fallthru
      _
    // Predicated region
    $region86: #{kpfcnn_forward.1} parent=1 // pred_check
      _
    $region87: #{kpfcnn_forward.1} parent=1 // pred_check_branch
      %119 = sbr.rel (0) target = $region89
    $region88: #{kpfcnn_forward.1} parent=1 // pred_region
      %121 = vsyncadd [#allocation10], 0
      %s123 = sshll.u32 %s21, 4
      %s124 = int_to_ptr.hbm [resolvable:$true] %s123
      %s125 = sshll.u32 [#allocation11], 4
      %s126 = int_to_ptr.vmem [resolvable:$true] %s125
      %128 = dma.hbm_to_vmem [thread:$0]  %s124, 16, %s126, [#allocation10]
    $region89: #{kpfcnn_forward.1} parent=1 // pred_fallthru
      _
    // Predicated region
    $region90: #{kpfcnn_forward.1} parent=1 // pred_check
      _
    $region91: #{kpfcnn_forward.1} parent=1 // pred_check_branch
      %130 = sbr.rel (0) target = $region93
    $region92: #{kpfcnn_forward.1} parent=1 // pred_region
      _
    $region93: #{kpfcnn_forward.1} parent=1 // pred_fallthru
      _
    // Predicated region
    $region94: #{kpfcnn_forward.1} parent=1 // pred_check
      _
    $region95: #{kpfcnn_forward.1} parent=1 // pred_check_branch
      %132 = sbr.rel (0) target = $region97
    $region96: #{kpfcnn_forward.1} parent=1 // pred_region
      _
    $region97: #{kpfcnn_forward.1} parent=1 // pred_fallthru
      _
    // Predicated region
    $region98: #{kpfcnn_forward.1} parent=1 // pred_check
      _
    $region99: #{kpfcnn_forward.1} parent=1 // pred_check_branch
      %134 = sbr.rel (0) target = $region101
    $region100: #{kpfcnn_forward.1} parent=1 // pred_region
      %136 = dma.done [#allocation5], 512
    $region101: #{kpfcnn_forward.1} parent=1 // pred_fallthru
      _
    // Predicated region
    $region102: #{kpfcnn_forward.1} parent=1 // pred_check
      _
    $region103: #{kpfcnn_forward.1} parent=1 // pred_check_branch
      %138 = sbr.rel (0) target = $region105
    $region104: #{kpfcnn_forward.1} parent=1 // pred_region
      %140 = dma.done [#allocation7], 16
    $region105: #{kpfcnn_forward.1} parent=1 // pred_fallthru
      _
    // Predicated region
    $region106: #{kpfcnn_forward.1} parent=1 // pred_check
      _
    $region107: #{kpfcnn_forward.1} parent=1 // pred_check_branch
      %142 = sbr.rel (0) target = $region109
    $region108: #{kpfcnn_forward.1} parent=1 // pred_region
      %144 = dma.done [#allocation7], 256
    $region109: #{kpfcnn_forward.1} parent=1 // pred_fallthru
      _
    // Predicated region
    $region110: #{kpfcnn_forward.1} parent=1 // pred_check
      _
    $region111: #{kpfcnn_forward.1} parent=1 // pred_check_branch
      %146 = sbr.rel (0) target = $region113
    $region112: #{kpfcnn_forward.1} parent=1 // pred_region
      %148 = dma.done [#allocation10], 16
    $region113: #{kpfcnn_forward.1} parent=1 // pred_fallthru
      _
    // Predicated region
    $region114: #{kpfcnn_forward.1} parent=1 // pred_check
      _
    $region115: #{kpfcnn_forward.1} parent=1 // pred_check_branch
      %150 = sbr.rel (0) target = $region117
    $region116: #{kpfcnn_forward.1} parent=1 // pred_region
      %152 = dma.done [#allocation10], 16
    $region117: #{kpfcnn_forward.1} parent=1 // pred_fallthru
      _
    %v154 = vld [vmem:[%s0] sm:$0xff]
    %v155 = vld [vmem:[%s0 + $0x8] sm:$0xff]
    %v156 = vld [vmem:[%s0 + $0x10] sm:$0xff]
    %v157 = vld [vmem:[%s0 + $0x18] sm:$0xff]
    %v158 = vld [vmem:[%s0 + $0x20] sm:$0xff]
    %v159 = vld [vmem:[%s0 + $0x28] sm:$0xff]
    %v160 = vld [vmem:[%s0 + $0x30] sm:$0xff]
    %v161 = vld [vmem:[%s0 + $0x38] sm:$0xff]
    %v162 = vld [vmem:[%s1] sm:$0x1]
    %164 = vset.pattern.permute.xlu0 0
    %165 = vperm.xlu0 %164, %v154
    %v166 = vpop.permute.xlu0 %165
    %169 = vset.pattern.permute.xlu0 0
    %170 = vperm.xlu0 %169, %v155
    %v171 = vpop.permute.xlu0 %170
    %174 = vset.pattern.permute.xlu0 0
    %175 = vperm.xlu0 %174, %v156
    %v176 = vpop.permute.xlu0 %175
    %179 = vset.pattern.permute.xlu0 0
    %180 = vperm.xlu0 %179, %v157
    %v181 = vpop.permute.xlu0 %180
    %184 = vset.pattern.permute.xlu0 0
    %185 = vperm.xlu0 %184, %v158
    %v186 = vpop.permute.xlu0 %185
    %189 = vset.pattern.permute.xlu0 0
    %190 = vperm.xlu0 %189, %v159
    %v191 = vpop.permute.xlu0 %190
    %194 = vset.pattern.permute.xlu0 0
    %195 = vperm.xlu0 %194, %v160
    %v196 = vpop.permute.xlu0 %195
    %199 = vset.pattern.permute.xlu0 0
    %200 = vperm.xlu0 %199, %v161
    %v201 = vpop.permute.xlu0 %200
    %v204 = vperm.slane %v162, 0
    %v206 = vmul.f32 %v166, %v204
    %v207 = vmul.f32 %v171, %v204
    %v208 = vmul.f32 %v176, %v204
    %v209 = vmul.f32 %v181, %v204
    %v210 = vmul.f32 %v186, %v204
    %v211 = vmul.f32 %v191, %v204
    %v212 = vmul.f32 %v196, %v204
    %v213 = vmul.f32 %v201, %v204
    %v214 = vld [vmem:[%s2] sm:$0x1]
    %v216 = vperm.slane %v214, 0
    %v218 = vadd.f32 %v206, %v216
    %v219 = vadd.f32 %v207, %v216
    %v220 = vadd.f32 %v208, %v216
    %v221 = vadd.f32 %v209, %v216
    %v222 = vadd.f32 %v210, %v216
    %v223 = vadd.f32 %v211, %v216
    %v224 = vadd.f32 %v212, %v216
    %v225 = vadd.f32 %v213, %v216
    %v226 = vmax.f32 %v218, 0.0
    %v227 = vmax.f32 %v219, 0.0
    %v228 = vmax.f32 %v220, 0.0
    %v229 = vmax.f32 %v221, 0.0
    %v230 = vmax.f32 %v222, 0.0
    %v231 = vmax.f32 %v223, 0.0
    %v232 = vmax.f32 %v224, 0.0
    %v233 = vmax.f32 %v225, 0.0
    %v234 = vlaneseq
    %v235 = vshrl.u32 %v234, 7
    %v236 = vadd.s32 %v235, 8
    %v237 = vadd.s32 %v235, 16
    %v238 = vadd.s32 %v235, 24
    %v239 = vlaneseq
    %v240 = vand.u32 %v239, 127
    %v241 = vmul.u32 %v235, 2
    %v242 = vmul.u32 %v236, 2
    %v243 = vmul.u32 %v237, 2
    %v244 = vmul.u32 %v238, 2
    %vm245 = vcmp.eq.s32.totalorder %v240, %v241
    %vm246 = vcmp.eq.s32.totalorder %v240, %v242
    %vm247 = vcmp.eq.s32.totalorder %v240, %v243
    %vm248 = vcmp.eq.s32.totalorder %v240, %v244
    %v249 = vsel %vm245, 1, 0
    %v250 = vsel %vm246, 1, 0
    %v251 = vsel %vm247, 1, 0
    %v252 = vsel %vm248, 1, 0
    %v253 = vcvt.s32.f32 %v249
    %v254 = vcvt.s32.f32 %v250
    %v255 = vcvt.s32.f32 %v251
    %v256 = vcvt.s32.f32 %v252
    %vm257 = vcmask 523264
    %v259 = vsel %vm257, %v253, 0
    %v262 = vsel %vm257, %v254, 0
    %v265 = vsel %vm257, %v255, 0
    %v268 = vsel %vm257, %v256, 0
    %270 = vmatpush.msra.mxu0 0.0
    %271 = vmatpush.msra.mxu0 0.0
    %272 = vmatpush.msra.mxu0 0.0
    %273 = vmatpush.msra.mxu0 0.0
    %274 = vmatpush.msra.mxu0 0.0
    %275 = vmatpush.msra.mxu0 0.0
    %276 = vmatpush.msra.mxu0 0.0
    %277 = vmatpush.msra.mxu0 0.0
    %278 = vmatpush.msra.mxu0 %v233
    %279 = vmatpush.msra.mxu0 %v232
    %280 = vmatpush.msra.mxu0 %v231
    %281 = vmatpush.msra.mxu0 %v230
    %282 = vmatpush.msra.mxu0 %v229
    %283 = vmatpush.msra.mxu0 %v228
    %284 = vmatpush.msra.mxu0 %v227
    %285 = vmatpush.msra.mxu0 %v226
    %286 = vmatmul.f32.gmra.mxu0 %v259
    %v287 = vpop.f32.mrf.mxu0
    %v288 = vadd.f32 0.0, %v287
    %289 = vmatmul.f32.gmra.mxu0 %v262
    %v290 = vpop.f32.mrf.mxu0
    %v291 = vadd.f32 0.0, %v290
    %292 = vmatmul.f32.gmra.mxu0 %v265
    %v293 = vpop.f32.mrf.mxu0
    %v294 = vadd.f32 0.0, %v293
    %295 = vmatmul.f32.gmra.mxu0 %v268
    %v296 = vpop.f32.mrf.mxu0
    %v297 = vadd.f32 0.0, %v296
    %298 = vdwg.mxu0
    %v299 = vpack.c.bf16 %v291, %v288
    %v300 = vpack.c.bf16 %v297, %v294
    %v301 = vld [vmem:[%s3] sm:$0xf]
    %v302 = vld [vmem:[%s3 + $0x4] sm:$0xf]
    %v303 = vld [vmem:[%s3 + $0x8] sm:$0xf]
    %v304 = vld [vmem:[%s3 + $0xc] sm:$0xf]
    %v305 = vld [vmem:[%s4] sm:$0x1]
    %v307 = vperm.slane %v305, 0
    %v313 = vunpack.c.l.b16 %v301
    %v314 = vunpack.c.l.b16 %v302
    %v315 = vunpack.c.l.b16 %v303
    %v316 = vunpack.c.l.b16 %v304
    %v317 = vpack.c.b16 %v314, %v313
    %v318 = vpack.c.b16 %v316, %v315
    %vm321 = vcmask 261120
    %v323 = vsel %vm321, %v299, 0
    %v326 = vsel %vm321, %v300, 0
    %328 = vmatpush.bf16.msra.mxu0 0
    %329 = vmatpush.bf16.msra.mxu0 0
    %330 = vmatpush.bf16.msra.mxu0 0
    %331 = vmatpush.bf16.msra.mxu0 0
    %332 = vmatpush.bf16.msra.mxu0 0
    %333 = vmatpush.bf16.msra.mxu0 0
    %334 = vmatpush.bf16.msra.mxu0 %v318
    %335 = vmatpush.bf16.msra.mxu0 %v317
    %336 = vmatmul.bf16.gmra.mxu0 %v323
    %v337 = vpop.f32.mrf.mxu0
    %v338 = vadd.f32 %v307, %v337
    %v339 = vpop.f32.mrf.mxu0
    %v340 = vadd.f32 %v307, %v339
    %341 = vmatmul.bf16.gmra.mxu0 %v326
    %v342 = vpop.f32.mrf.mxu0
    %v343 = vadd.f32 %v307, %v342
    %v344 = vpop.f32.mrf.mxu0
    %v345 = vadd.f32 %v307, %v344
    %346 = vdwg.mxu0
    %v347 = vmax.f32 %v338, 0.0
    %v348 = vmax.f32 %v340, 0.0
    %v349 = vmax.f32 %v343, 0.0
    %v350 = vmax.f32 %v345, 0.0
    %v351 = vpack.c.bf16 %v348, %v347
    %v352 = vpack.c.bf16 %v350, %v349
    %v353 = vld [vmem:[#allocation4] sm:$0xf]
    %v354 = vld [vmem:[#allocation4 + $0x4] sm:$0xf]
    %v355 = vld [vmem:[#allocation4 + $0x8] sm:$0xf]
    %v356 = vld [vmem:[#allocation4 + $0xc] sm:$0xf]
    %v357 = vld [vmem:[#allocation4 + $0x10] sm:$0xf]
    %v358 = vld [vmem:[#allocation4 + $0x14] sm:$0xf]
    %v359 = vld [vmem:[#allocation4 + $0x18] sm:$0xf]
    %v360 = vld [vmem:[#allocation4 + $0x1c] sm:$0xf]
    %v361 = vld [vmem:[#allocation6] sm:$0x1]
    %v363 = vperm.slane %v361, 0
    %v373 = vunpack.c.l.b16 %v353
    %v374 = vunpack.c.l.b16 %v354
    %v375 = vunpack.c.l.b16 %v355
    %v376 = vunpack.c.l.b16 %v356
    %v377 = vunpack.c.l.b16 %v357
    %v378 = vunpack.c.l.b16 %v358
    %v379 = vunpack.c.l.b16 %v359
    %v380 = vunpack.c.l.b16 %v360
    %v381 = vpack.c.b16 %v374, %v373
    %v382 = vpack.c.b16 %v376, %v375
    %v383 = vpack.c.b16 %v378, %v377
    %v384 = vpack.c.b16 %v380, %v379
    %v390 = vsel %vm257, %v351, 0
    %v393 = vsel %vm257, %v352, 0
    %395 = vmatpush.bf16.msra.mxu0 0
    %396 = vmatpush.bf16.msra.mxu0 0
    %397 = vmatpush.bf16.msra.mxu0 0
    %398 = vmatpush.bf16.msra.mxu0 0
    %399 = vmatpush.bf16.msra.mxu0 %v384
    %400 = vmatpush.bf16.msra.mxu0 %v383
    %401 = vmatpush.bf16.msra.mxu0 %v382
    %402 = vmatpush.bf16.msra.mxu0 %v381
    %403 = vmatmul.bf16.gmra.mxu0 %v390
    %v404 = vpop.f32.mrf.mxu0
    %v405 = vadd.f32 %v363, %v404
    %v406 = vpop.f32.mrf.mxu0
    %v407 = vadd.f32 %v363, %v406
    %408 = vmatmul.bf16.gmra.mxu0 %v393
    %v409 = vpop.f32.mrf.mxu0
    %v410 = vadd.f32 %v363, %v409
    %v411 = vpop.f32.mrf.mxu0
    %v412 = vadd.f32 %v363, %v411
    %413 = vdwg.mxu0
    %v414 = vpack.c.bf16 %v407, %v405
    %v415 = vpack.c.bf16 %v412, %v410
    %v416 = vld [vmem:[%s7] sm:$0xf]
    %v417 = vld [vmem:[%s7 + $0x4] sm:$0xf]
    %v418 = vld [vmem:[%s7 + $0x8] sm:$0xf]
    %v419 = vld [vmem:[%s7 + $0xc] sm:$0xf]
    %v420 = vld [vmem:[%s7 + $0x10] sm:$0xf]
    %v421 = vld [vmem:[%s7 + $0x14] sm:$0xf]
    %v422 = vld [vmem:[%s7 + $0x18] sm:$0xf]
    %v423 = vld [vmem:[%s7 + $0x1c] sm:$0xf]
    %v424 = vld [vmem:[%s7 + $0x20] sm:$0xf]
    %v425 = vld [vmem:[%s7 + $0x24] sm:$0xf]
    %v426 = vld [vmem:[%s7 + $0x28] sm:$0xf]
    %v427 = vld [vmem:[%s7 + $0x2c] sm:$0xf]
    %v428 = vld [vmem:[%s7 + $0x30] sm:$0xf]
    %v429 = vld [vmem:[%s7 + $0x34] sm:$0xf]
    %v430 = vld [vmem:[%s7 + $0x38] sm:$0xf]
    %v431 = vld [vmem:[%s7 + $0x3c] sm:$0xf]
    %v432 = vld [vmem:[%s8] sm:$0x1]
    %v434 = vperm.slane %v432, 0
    %v452 = vunpack.c.l.b16 %v416
    %v453 = vunpack.c.l.b16 %v417
    %v454 = vunpack.c.l.b16 %v418
    %v455 = vunpack.c.l.b16 %v419
    %v456 = vunpack.c.l.b16 %v420
    %v457 = vunpack.c.l.b16 %v421
    %v458 = vunpack.c.l.b16 %v422
    %v459 = vunpack.c.l.b16 %v423
    %v460 = vunpack.c.l.b16 %v424
    %v461 = vunpack.c.l.b16 %v425
    %v462 = vunpack.c.l.b16 %v426
    %v463 = vunpack.c.l.b16 %v427
    %v464 = vunpack.c.l.b16 %v428
    %v465 = vunpack.c.l.b16 %v429
    %v466 = vunpack.c.l.b16 %v430
    %v467 = vunpack.c.l.b16 %v431
    %v468 = vpack.c.b16 %v453, %v452
    %v469 = vpack.c.b16 %v455, %v454
    %v470 = vpack.c.b16 %v457, %v456
    %v471 = vpack.c.b16 %v459, %v458
    %v472 = vpack.c.b16 %v461, %v460
    %v473 = vpack.c.b16 %v463, %v462
    %v474 = vpack.c.b16 %v465, %v464
    %v475 = vpack.c.b16 %v467, %v466
    %484 = vmatpush.bf16.msra.mxu0 %v475
    %485 = vmatpush.bf16.msra.mxu0 %v474
    %486 = vmatpush.bf16.msra.mxu0 %v473
    %487 = vmatpush.bf16.msra.mxu0 %v472
    %488 = vmatpush.bf16.msra.mxu0 %v471
    %489 = vmatpush.bf16.msra.mxu0 %v470
    %490 = vmatpush.bf16.msra.mxu0 %v469
    %491 = vmatpush.bf16.msra.mxu0 %v468
    %492 = vmatmul.bf16.gmra.mxu0 %v414
    %v493 = vpop.f32.mrf.mxu0
    %v494 = vadd.f32 %v434, %v493
    %v495 = vpop.f32.mrf.mxu0
    %v496 = vadd.f32 %v434, %v495
    %497 = vmatmul.bf16.gmra.mxu0 %v415
    %v498 = vpop.f32.mrf.mxu0
    %v499 = vadd.f32 %v434, %v498
    %v500 = vpop.f32.mrf.mxu0
    %v501 = vadd.f32 %v434, %v500
    %502 = vdwg.mxu0
    %v503 = vmax.f32 %v494, 0.0
    %v504 = vmax.f32 %v496, 0.0
    %v505 = vmax.f32 %v499, 0.0
    %v506 = vmax.f32 %v501, 0.0
    %v507 = vpack.c.bf16 %v504, %v503
    %v508 = vpack.c.bf16 %v506, %v505
    %v509 = vld [vmem:[%s9] sm:$0xf]
    %v510 = vld [vmem:[%s9 + $0x4] sm:$0xf]
    %v511 = vld [vmem:[%s9 + $0x8] sm:$0xf]
    %v512 = vld [vmem:[%s9 + $0xc] sm:$0xf]
    %v513 = vld [vmem:[%s9 + $0x10] sm:$0xf]
    %v514 = vld [vmem:[%s9 + $0x14] sm:$0xf]
    %v515 = vld [vmem:[%s9 + $0x18] sm:$0xf]
    %v516 = vld [vmem:[%s9 + $0x1c] sm:$0xf]
    %v517 = vld [vmem:[%s9 + $0x20] sm:$0xf]
    %v518 = vld [vmem:[%s9 + $0x24] sm:$0xf]
    %v519 = vld [vmem:[%s9 + $0x28] sm:$0xf]
    %v520 = vld [vmem:[%s9 + $0x2c] sm:$0xf]
    %v521 = vld [vmem:[%s9 + $0x30] sm:$0xf]
    %v522 = vld [vmem:[%s9 + $0x34] sm:$0xf]
    %v523 = vld [vmem:[%s9 + $0x38] sm:$0xf]
    %v524 = vld [vmem:[%s9 + $0x3c] sm:$0xf]
    %v525 = vld [vmem:[%s10] sm:$0x1]
    %v527 = vperm.slane %v525, 0
    %v545 = vunpack.c.l.b16 %v509
    %v546 = vunpack.c.l.b16 %v510
    %v547 = vunpack.c.l.b16 %v511
    %v548 = vunpack.c.l.b16 %v512
    %v549 = vunpack.c.l.b16 %v513
    %v550 = vunpack.c.l.b16 %v514
    %v551 = vunpack.c.l.b16 %v515
    %v552 = vunpack.c.l.b16 %v516
    %v553 = vunpack.c.l.b16 %v517
    %v554 = vunpack.c.l.b16 %v518
    %v555 = vunpack.c.l.b16 %v519
    %v556 = vunpack.c.l.b16 %v520
    %v557 = vunpack.c.l.b16 %v521
    %v558 = vunpack.c.l.b16 %v522
    %v559 = vunpack.c.l.b16 %v523
    %v560 = vunpack.c.l.b16 %v524
    %v561 = vpack.c.b16 %v546, %v545
    %v562 = vpack.c.b16 %v548, %v547
    %v563 = vpack.c.b16 %v550, %v549
    %v564 = vpack.c.b16 %v552, %v551
    %v565 = vpack.c.b16 %v554, %v553
    %v566 = vpack.c.b16 %v556, %v555
    %v567 = vpack.c.b16 %v558, %v557
    %v568 = vpack.c.b16 %v560, %v559
    %577 = vmatpush.bf16.msra.mxu0 %v568
    %578 = vmatpush.bf16.msra.mxu0 %v567
    %579 = vmatpush.bf16.msra.mxu0 %v566
    %580 = vmatpush.bf16.msra.mxu0 %v565
    %581 = vmatpush.bf16.msra.mxu0 %v564
    %582 = vmatpush.bf16.msra.mxu0 %v563
    %583 = vmatpush.bf16.msra.mxu0 %v562
    %584 = vmatpush.bf16.msra.mxu0 %v561
    %585 = vmatmul.bf16.gmra.mxu0 %v507
    %v586 = vpop.f32.mrf.mxu0
    %v587 = vadd.f32 %v527, %v586
    %v588 = vpop.f32.mrf.mxu0
    %v589 = vadd.f32 %v527, %v588
    %590 = vmatmul.bf16.gmra.mxu0 %v508
    %v591 = vpop.f32.mrf.mxu0
    %v592 = vadd.f32 %v527, %v591
    %v593 = vpop.f32.mrf.mxu0
    %v594 = vadd.f32 %v527, %v593
    %595 = vdwg.mxu0
    %v596 = vpack.c.bf16 %v589, %v587
    %v597 = vpack.c.bf16 %v594, %v592
    %v598 = vld [vmem:[%s11] sm:$0xf]
    %v599 = vld [vmem:[%s11 + $0x4] sm:$0xf]
    %v600 = vld [vmem:[%s11 + $0x8] sm:$0xf]
    %v601 = vld [vmem:[%s11 + $0xc] sm:$0xf]
    %v602 = vld [vmem:[%s11 + $0x10] sm:$0xf]
    %v603 = vld [vmem:[%s11 + $0x14] sm:$0xf]
    %v604 = vld [vmem:[%s11 + $0x18] sm:$0xf]
    %v605 = vld [vmem:[%s11 + $0x1c] sm:$0xf]
    %v606 = vld [vmem:[%s11 + $0x20] sm:$0xf]
    %v607 = vld [vmem:[%s11 + $0x24] sm:$0xf]
    %v608 = vld [vmem:[%s11 + $0x28] sm:$0xf]
    %v609 = vld [vmem:[%s11 + $0x2c] sm:$0xf]
    %v610 = vld [vmem:[%s11 + $0x30] sm:$0xf]
    %v611 = vld [vmem:[%s11 + $0x34] sm:$0xf]
    %v612 = vld [vmem:[%s11 + $0x38] sm:$0xf]
    %v613 = vld [vmem:[%s11 + $0x3c] sm:$0xf]
    %v614 = vld [vmem:[%s12] sm:$0x1]
    %v616 = vperm.slane %v614, 0
    %v634 = vunpack.c.l.b16 %v598
    %v635 = vunpack.c.l.b16 %v599
    %v636 = vunpack.c.l.b16 %v600
    %v637 = vunpack.c.l.b16 %v601
    %v638 = vunpack.c.l.b16 %v602
    %v639 = vunpack.c.l.b16 %v603
    %v640 = vunpack.c.l.b16 %v604
    %v641 = vunpack.c.l.b16 %v605
    %v642 = vunpack.c.l.b16 %v606
    %v643 = vunpack.c.l.b16 %v607
    %v644 = vunpack.c.l.b16 %v608
    %v645 = vunpack.c.l.b16 %v609
    %v646 = vunpack.c.l.b16 %v610
    %v647 = vunpack.c.l.b16 %v611
    %v648 = vunpack.c.l.b16 %v612
    %v649 = vunpack.c.l.b16 %v613
    %v650 = vpack.c.b16 %v635, %v634
    %v651 = vpack.c.b16 %v637, %v636
    %v652 = vpack.c.b16 %v639, %v638
    %v653 = vpack.c.b16 %v641, %v640
    %v654 = vpack.c.b16 %v643, %v642
    %v655 = vpack.c.b16 %v645, %v644
    %v656 = vpack.c.b16 %v647, %v646
    %v657 = vpack.c.b16 %v649, %v648
    %666 = vmatpush.bf16.msra.mxu0 %v657
    %667 = vmatpush.bf16.msra.mxu0 %v656
    %668 = vmatpush.bf16.msra.mxu0 %v655
    %669 = vmatpush.bf16.msra.mxu0 %v654
    %670 = vmatpush.bf16.msra.mxu0 %v653
    %671 = vmatpush.bf16.msra.mxu0 %v652
    %672 = vmatpush.bf16.msra.mxu0 %v651
    %673 = vmatpush.bf16.msra.mxu0 %v650
    %674 = vmatmul.bf16.gmra.mxu0 %v596
    %v675 = vpop.f32.mrf.mxu0
    %v676 = vadd.f32 %v616, %v675
    %v677 = vpop.f32.mrf.mxu0
    %v678 = vadd.f32 %v616, %v677
    %679 = vmatmul.bf16.gmra.mxu0 %v597
    %v680 = vpop.f32.mrf.mxu0
    %v681 = vadd.f32 %v616, %v680
    %v682 = vpop.f32.mrf.mxu0
    %v683 = vadd.f32 %v616, %v682
    %684 = vdwg.mxu0
    %v685 = vld [vmem:[%s13] sm:$0x1]
    %v687 = vperm.slane %v685, 0
    %v689 = vmul.f32 %v676, %v687
    %v690 = vmul.f32 %v678, %v687
    %v691 = vmul.f32 %v681, %v687
    %v692 = vmul.f32 %v683, %v687
    %693 = vadd.xlane.f32.xlu0 %v689
    %v694 = vpop.xlane.xlu0 %693
    %695 = vadd.xlane.f32.xlu0 %v690
    %v696 = vpop.xlane.xlu0 %695
    %697 = vadd.xlane.f32.xlu0 %v691
    %v698 = vpop.xlane.xlu0 %697
    %699 = vadd.xlane.f32.xlu0 %v692
    %v700 = vpop.xlane.xlu0 %699
    %s701 = sld [smem:[#allocation3]]
    %v702 = vstv %s701
    %v703 = vadd.f32 %v694, %v702
    %v704 = vadd.f32 %v696, %v702
    %v705 = vadd.f32 %v698, %v702
    %v706 = vadd.f32 %v700, %v702
    %v707 = vmul.f32 %v676, %v676
    %v708 = vmul.f32 %v678, %v678
    %v709 = vmul.f32 %v681, %v681
    %v710 = vmul.f32 %v683, %v683
    %711 = vadd.xlane.f32.xlu0 %v707
    %v712 = vpop.xlane.xlu0 %711
    %713 = vadd.xlane.f32.xlu0 %v708
    %v714 = vpop.xlane.xlu0 %713
    %715 = vadd.xlane.f32.xlu0 %v709
    %v716 = vpop.xlane.xlu0 %715
    %717 = vadd.xlane.f32.xlu0 %v710
    %v718 = vpop.xlane.xlu0 %717
    %v719 = vmax.f32 %v712, 1e-24
    %v720 = vmax.f32 %v714, 1e-24
    %v721 = vmax.f32 %v716, 1e-24
    %v722 = vmax.f32 %v718, 1e-24
    %v723 = vrsqrt.pop %v719
    %v724 = vmul.f32 %v723, %v719
    %v725 = vmul.f32 %v724, %v723
    %v726 = vmul.f32 0.5, %v725
    %v727 = vsub.f32 1.5, %v726
    %v728 = vmul.f32 %v723, %v727
    %vm729 = vweird.f32 %v719
    %vm730 = vweird.f32 %v723
    %vm731 = vmor %vm729, %vm730
    %v732 = vsel %vm731, %v723, %v728
    %v733 = vrsqrt.pop %v720
    %v734 = vmul.f32 %v733, %v720
    %v735 = vmul.f32 %v734, %v733
    %v736 = vmul.f32 0.5, %v735
    %v737 = vsub.f32 1.5, %v736
    %v738 = vmul.f32 %v733, %v737
    %vm739 = vweird.f32 %v720
    %vm740 = vweird.f32 %v733
    %vm741 = vmor %vm739, %vm740
    %v742 = vsel %vm741, %v733, %v738
    %v743 = vrsqrt.pop %v721
    %v744 = vmul.f32 %v743, %v721
    %v745 = vmul.f32 %v744, %v743
    %v746 = vmul.f32 0.5, %v745
    %v747 = vsub.f32 1.5, %v746
    %v748 = vmul.f32 %v743, %v747
    %vm749 = vweird.f32 %v721
    %vm750 = vweird.f32 %v743
    %vm751 = vmor %vm749, %vm750
    %v752 = vsel %vm751, %v743, %v748
    %v753 = vrsqrt.pop %v722
    %v754 = vmul.f32 %v753, %v722
    %v755 = vmul.f32 %v754, %v753
    %v756 = vmul.f32 0.5, %v755
    %v757 = vsub.f32 1.5, %v756
    %v758 = vmul.f32 %v753, %v757
    %vm759 = vweird.f32 %v722
    %vm760 = vweird.f32 %v753
    %vm761 = vmor %vm759, %vm760
    %v762 = vsel %vm761, %v753, %v758
    %v763 = vmul.f32 %v676, %v732
    %v764 = vmul.f32 %v678, %v742
    %v765 = vmul.f32 %v681, %v752
    %v766 = vmul.f32 %v683, %v762
    %s767 = sld [smem:[#allocation2]]
    %v768 = vstv %s767
    %v769 = vmul.f32 %v768, 1.442695
    %v770 = vpow.pop %v769
    %v771 = vadd.f32 %v770, 0.03
    %v772 = vrcp.pop %v771
    %v773 = vmul.f32 %v771, %v772
    %v774 = vsub.f32 1.0, %v773
    %v775 = vmul.f32 %v772, %v774
    %v776 = vadd.f32 %v772, %v775
    %vm777 = vweird.f32 %v771
    %vm778 = vweird.f32 %v772
    %vm779 = vmor %vm777, %vm778
    %v780 = vsel %vm779, %v772, %v776
    %v781 = vand.u32 2147483647, %v771
    %vm782 = vcmp.eq.f32.partialorder %v781, 8.507059e+37
    %v783 = vand.u32 %v771, 2147483648
    %v784 = vor.u32 1.1754944e-38, %v783
    %v785 = vsel %vm782, %v784, %v780
    %v786 = vmul.f32 1.0, %v785
    %787 = vmatpush.xpose.msra.mxu0 0.0
    %788 = vmatpush.xpose.msra.mxu0 0.0
    %789 = vmatpush.xpose.msra.mxu0 0.0
    %790 = vmatpush.xpose.msra.mxu0 0.0
    %791 = vmatpush.xpose.msra.mxu0 0.0
    %792 = vmatpush.xpose.msra.mxu0 0.0
    %793 = vmatpush.xpose.msra.mxu0 0.0
    %794 = vmatpush.xpose.msra.mxu0 0.0
    %795 = vmatpush.xpose.msra.mxu0 0.0
    %796 = vmatpush.xpose.msra.mxu0 0.0
    %797 = vmatpush.xpose.msra.mxu0 0.0
    %798 = vmatpush.xpose.msra.mxu0 0.0
    %799 = vmatpush.xpose.msra.mxu0 0.0
    %800 = vmatpush.xpose.msra.mxu0 0.0
    %801 = vmatpush.xpose.msra.mxu0 %v766
    %802 = vmatpush.xpose.msra.mxu0 %v765
    %803 = vmatmul.f32.gmra.mxu0 %v763
    %v804 = vpop.f32.mrf.mxu0
    %v805 = vadd.f32 0.0, %v804
    %806 = vmatmul.f32.gmra.mxu0 %v764
    %v807 = vpop.f32.mrf.mxu0
    %v808 = vadd.f32 0.0, %v807
    %809 = vdwg.mxu0
    %v810 = vmul.f32 %v805, %v786
    %v811 = vmul.f32 %v808, %v786
    %vm812 = vcmask 130048
    %v813 = vsel %vm812, %v810, -inf
    %814 = vmax.xlane.f32.xlu0 %v813
    %v815 = vpop.xlane.xlu0 %814
    %v816 = vsel %vm812, %v811, -inf
    %817 = vmax.xlane.f32.xlu0 %v816
    %v818 = vpop.xlane.xlu0 %817
    %v819 = vsub.f32 %v810, %v815
    %v820 = vsub.f32 %v811, %v818
    %v821 = vmul.f32 %v819, 1.442695
    %v822 = vpow.pop %v821
    %v823 = vmul.f32 %v820, 1.442695
    %v824 = vpow.pop %v823
    %v825 = vsel %vm812, %v822, 0.0
    %826 = vadd.xlane.f32.xlu0 %v825
    %v827 = vpop.xlane.xlu0 %826
    %v828 = vsel %vm812, %v824, 0.0
    %829 = vadd.xlane.f32.xlu0 %v828
    %v830 = vpop.xlane.xlu0 %829
    %v831 = vrcp.pop %v827
    %v832 = vrcp.pop %v830
    %v833 = vmul.f32 %v822, %v831
    %v834 = vmul.f32 %v824, %v832
    %v836 = vsel %vm812, %v833, 0
    %v839 = vsel %vm812, %v834, 0
    %841 = vmatpush.msra.mxu0 0.0
    %842 = vmatpush.msra.mxu0 0.0
    %843 = vmatpush.msra.mxu0 0.0
    %844 = vmatpush.msra.mxu0 0.0
    %845 = vmatpush.msra.mxu0 0.0
    %846 = vmatpush.msra.mxu0 0.0
    %847 = vmatpush.msra.mxu0 0.0
    %848 = vmatpush.msra.mxu0 0.0
    %849 = vmatpush.msra.mxu0 0.0
    %850 = vmatpush.msra.mxu0 0.0
    %851 = vmatpush.msra.mxu0 0.0
    %852 = vmatpush.msra.mxu0 0.0
    %853 = vmatpush.msra.mxu0 0.0
    %854 = vmatpush.msra.mxu0 0.0
    %855 = vmatpush.msra.mxu0 %v706
    %856 = vmatpush.msra.mxu0 %v705
    %857 = vmatmul.f32.gmra.mxu0 %v836
    %v858 = vpop.f32.mrf.mxu0
    %v859 = vadd.f32 0.0, %v858
    %860 = vmatmul.f32.gmra.mxu0 %v839
    %v861 = vpop.f32.mrf.mxu0
    %v862 = vadd.f32 0.0, %v861
    %863 = vdwg.mxu0
    %v864 = vmax.f32 %v813, %v816
    %v865 = vrot.slane %v864, 4
    %v866 = vmax.f32 %v864, %v865
    %v867 = vrot.slane %v866, 2
    %v868 = vmax.f32 %v866, %v867
    %v869 = vrot.slane %v868, 1
    %v870 = vmax.f32 %v868, %v869
    %v871 = vsub.f32 %v810, %v870
    %v872 = vsub.f32 %v811, %v870
    %v873 = vmul.f32 %v871, 1.442695
    %v874 = vpow.pop %v873
    %v875 = vmul.f32 %v872, 1.442695
    %v876 = vpow.pop %v875
    %v877 = vsel %vm812, %v874, 0.0
    %v878 = vsel %vm812, %v876, 0.0
    %v879 = vadd.f32 %v877, %v878
    %v880 = vrot.slane %v879, 4
    %v881 = vadd.f32 %v879, %v880
    %v882 = vrot.slane %v881, 2
    %v883 = vadd.f32 %v881, %v882
    %v884 = vrot.slane %v883, 1
    %v885 = vadd.f32 %v883, %v884
    %v886 = vrcp.pop %v885
    %v887 = vmul.f32 %v874, %v886
    %v888 = vmul.f32 %v876, %v886
    %889 = vxpose.xlu0.b32.start [1/16] %v887, 128
    %890 = vxpose.xlu0.b32.cont [2/16] %v888, 128
    %891 = vxpose.xlu0.b32.cont [3/16] 0.0, 128
    %892 = vxpose.xlu0.b32.cont [4/16] 0.0, 128
    %893 = vxpose.xlu0.b32.cont [5/16] 0.0, 128
    %894 = vxpose.xlu0.b32.cont [6/16] 0.0, 128
    %895 = vxpose.xlu0.b32.cont [7/16] 0.0, 128
    %896 = vxpose.xlu0.b32.cont [8/16] 0.0, 128
    %897 = vxpose.xlu0.b32.cont [9/16] 0.0, 128
    %898 = vxpose.xlu0.b32.cont [10/16] 0.0, 128
    %899 = vxpose.xlu0.b32.cont [11/16] 0.0, 128
    %900 = vxpose.xlu0.b32.cont [12/16] 0.0, 128
    %901 = vxpose.xlu0.b32.cont [13/16] 0.0, 128
    %902 = vxpose.xlu0.b32.cont [14/16] 0.0, 128
    %903 = vxpose.xlu0.b32.cont [15/16] 0.0, 128
    %904 = vxpose.xlu0.b32.end [16/16] 0.0, 128
    %v905 = vpop.trf.xlu0
    %v906 = vpop.trf.xlu0
    %v907 = vpop.trf.xlu0
    %v908 = vpop.trf.xlu0
    %v909 = vpop.trf.xlu0
    %v910 = vpop.trf.xlu0
    %v911 = vpop.trf.xlu0
    %v912 = vpop.trf.xlu0
    %v913 = vpop.trf.xlu0
    %v914 = vpop.trf.xlu0
    %v915 = vpop.trf.xlu0
    %v916 = vpop.trf.xlu0
    %v917 = vpop.trf.xlu0
    %v918 = vpop.trf.xlu0
    %v919 = vpop.trf.xlu0
    %v920 = vpop.trf.xlu0
    %v922 = vsel %vm812, %v905, 0
    %v925 = vsel %vm812, %v906, 0
    %927 = vmatpush.msra.mxu0 0.0
    %928 = vmatpush.msra.mxu0 0.0
    %929 = vmatpush.msra.mxu0 0.0
    %930 = vmatpush.msra.mxu0 0.0
    %931 = vmatpush.msra.mxu0 0.0
    %932 = vmatpush.msra.mxu0 0.0
    %933 = vmatpush.msra.mxu0 0.0
    %934 = vmatpush.msra.mxu0 0.0
    %935 = vmatpush.msra.mxu0 0.0
    %936 = vmatpush.msra.mxu0 0.0
    %937 = vmatpush.msra.mxu0 0.0
    %938 = vmatpush.msra.mxu0 0.0
    %939 = vmatpush.msra.mxu0 0.0
    %940 = vmatpush.msra.mxu0 0.0
    %941 = vmatpush.msra.mxu0 %v704
    %942 = vmatpush.msra.mxu0 %v703
    %943 = vmatmul.f32.gmra.mxu0 %v922
    %v944 = vpop.f32.mrf.mxu0
    %v945 = vadd.f32 0.0, %v944
    %946 = vmatmul.f32.gmra.mxu0 %v925
    %v947 = vpop.f32.mrf.mxu0
    %v948 = vadd.f32 0.0, %v947
    %949 = vdwg.mxu0
    %v950 = vld [vmem:[%s16] sm:$0x3]
    %v951 = vld [vmem:[%s17] sm:$0x3]
    %v952 = vpack.c.bf16 %v678, %v676
    %v953 = vpack.c.bf16 %v683, %v681
    %v954 = vld [vmem:[%s14] sm:$0xf]
    %v955 = vld [vmem:[%s14 + $0x4] sm:$0xf]
    %v956 = vld [vmem:[%s14 + $0x8] sm:$0xf]
    %v957 = vld [vmem:[%s14 + $0xc] sm:$0xf]
    %v958 = vld [vmem:[%s14 + $0x10] sm:$0xf]
    %v959 = vld [vmem:[%s14 + $0x14] sm:$0xf]
    %v960 = vld [vmem:[%s14 + $0x18] sm:$0xf]
    %v961 = vld [vmem:[%s14 + $0x1c] sm:$0xf]
    %v962 = vld [vmem:[%s14 + $0x20] sm:$0xf]
    %v963 = vld [vmem:[%s14 + $0x24] sm:$0xf]
    %v964 = vld [vmem:[%s14 + $0x28] sm:$0xf]
    %v965 = vld [vmem:[%s14 + $0x2c] sm:$0xf]
    %v966 = vld [vmem:[%s14 + $0x30] sm:$0xf]
    %v967 = vld [vmem:[%s14 + $0x34] sm:$0xf]
    %v968 = vld [vmem:[%s14 + $0x38] sm:$0xf]
    %v969 = vld [vmem:[%s14 + $0x3c] sm:$0xf]
    %v970 = vperm.slane %v950, 0
    %v971 = vmul.f32 %v703, %v970
    %v972 = vmul.f32 %v704, %v970
    %v973 = vmul.f32 %v705, %v970
    %v974 = vmul.f32 %v706, %v970
    %v991 = vunpack.c.l.b16 %v954
    %v992 = vunpack.c.l.b16 %v955
    %v993 = vunpack.c.l.b16 %v956
    %v994 = vunpack.c.l.b16 %v957
    %v995 = vunpack.c.l.b16 %v958
    %v996 = vunpack.c.l.b16 %v959
    %v997 = vunpack.c.l.b16 %v960
    %v998 = vunpack.c.l.b16 %v961
    %v999 = vunpack.c.l.b16 %v962
    %v1000 = vunpack.c.l.b16 %v963
    %v1001 = vunpack.c.l.b16 %v964
    %v1002 = vunpack.c.l.b16 %v965
    %v1003 = vunpack.c.l.b16 %v966
    %v1004 = vunpack.c.l.b16 %v967
    %v1005 = vunpack.c.l.b16 %v968
    %v1006 = vunpack.c.l.b16 %v969
    %v1007 = vpack.c.b16 %v992, %v991
    %v1008 = vpack.c.b16 %v994, %v993
    %v1009 = vpack.c.b16 %v996, %v995
    %v1010 = vpack.c.b16 %v998, %v997
    %v1011 = vpack.c.b16 %v1000, %v999
    %v1012 = vpack.c.b16 %v1002, %v1001
    %v1013 = vpack.c.b16 %v1004, %v1003
    %v1014 = vpack.c.b16 %v1006, %v1005
    %1023 = vmatpush.bf16.msra.mxu0 %v1014
    %1024 = vmatpush.bf16.msra.mxu0 %v1013
    %1025 = vmatpush.bf16.msra.mxu0 %v1012
    %1026 = vmatpush.bf16.msra.mxu0 %v1011
    %1027 = vmatpush.bf16.msra.mxu0 %v1010
    %1028 = vmatpush.bf16.msra.mxu0 %v1009
    %1029 = vmatpush.bf16.msra.mxu0 %v1008
    %1030 = vmatpush.bf16.msra.mxu0 %v1007
    %1031 = vmatmul.bf16.gmra.mxu0 %v952
    %v1032 = vpop.f32.mrf.mxu0
    %v1033 = vadd.f32 %v971, %v1032
    %v1034 = vpop.f32.mrf.mxu0
    %v1035 = vadd.f32 %v972, %v1034
    %1036 = vmatmul.bf16.gmra.mxu0 %v953
    %v1037 = vpop.f32.mrf.mxu0
    %v1038 = vadd.f32 %v973, %v1037
    %v1039 = vpop.f32.mrf.mxu0
    %v1040 = vadd.f32 %v974, %v1039
    %1041 = vdwg.mxu0
    %1043 = vset.pattern.permute.xlu0 0
    %1044 = vperm.xlu0 %1043, %v859
    %v1045 = vpop.permute.xlu0 %1044
    %1048 = vset.pattern.permute.xlu0 0
    %1049 = vperm.xlu0 %1048, %v862
    %v1050 = vpop.permute.xlu0 %1049
    %1053 = vset.pattern.permute.xlu0 0
    %1054 = vperm.xlu0 %1053, %v945
    %v1055 = vpop.permute.xlu0 %1054
    %1058 = vset.pattern.permute.xlu0 0
    %1059 = vperm.xlu0 %1058, %v948
    %v1060 = vpop.permute.xlu0 %1059
    %v1062 = vperm.slane %v950, 1
    %v1063 = vmul.f32 %v1045, %v1062
    %v1064 = vmul.f32 %v1050, %v1062
    %v1065 = vmul.f32 %v1055, %v1062
    %v1066 = vmul.f32 %v1060, %v1062
    %v1067 = vadd.f32 %v1033, %v1063
    %v1068 = vadd.f32 %v1035, %v1064
    %v1069 = vadd.f32 %v1038, %v1065
    %v1070 = vadd.f32 %v1040, %v1066
    %v1071 = vld [vmem:[%s15] sm:$0xf]
    %v1072 = vld [vmem:[%s15 + $0x4] sm:$0xf]
    %v1073 = vld [vmem:[%s15 + $0x8] sm:$0xf]
    %v1074 = vld [vmem:[%s15 + $0xc] sm:$0xf]
    %v1075 = vld [vmem:[%s15 + $0x10] sm:$0xf]
    %v1076 = vld [vmem:[%s15 + $0x14] sm:$0xf]
    %v1077 = vld [vmem:[%s15 + $0x18] sm:$0xf]
    %v1078 = vld [vmem:[%s15 + $0x1c] sm:$0xf]
    %v1079 = vld [vmem:[%s15 + $0x20] sm:$0xf]
    %v1080 = vld [vmem:[%s15 + $0x24] sm:$0xf]
    %v1081 = vld [vmem:[%s15 + $0x28] sm:$0xf]
    %v1082 = vld [vmem:[%s15 + $0x2c] sm:$0xf]
    %v1083 = vld [vmem:[%s15 + $0x30] sm:$0xf]
    %v1084 = vld [vmem:[%s15 + $0x34] sm:$0xf]
    %v1085 = vld [vmem:[%s15 + $0x38] sm:$0xf]
    %v1086 = vld [vmem:[%s15 + $0x3c] sm:$0xf]
    %v1087 = vperm.slane %v951, 0
    %v1088 = vmul.f32 %v703, %v1087
    %v1089 = vmul.f32 %v704, %v1087
    %v1090 = vmul.f32 %v705, %v1087
    %v1091 = vmul.f32 %v706, %v1087
    %v1108 = vunpack.c.l.b16 %v1071
    %v1109 = vunpack.c.l.b16 %v1072
    %v1110 = vunpack.c.l.b16 %v1073
    %v1111 = vunpack.c.l.b16 %v1074
    %v1112 = vunpack.c.l.b16 %v1075
    %v1113 = vunpack.c.l.b16 %v1076
    %v1114 = vunpack.c.l.b16 %v1077
    %v1115 = vunpack.c.l.b16 %v1078
    %v1116 = vunpack.c.l.b16 %v1079
    %v1117 = vunpack.c.l.b16 %v1080
    %v1118 = vunpack.c.l.b16 %v1081
    %v1119 = vunpack.c.l.b16 %v1082
    %v1120 = vunpack.c.l.b16 %v1083
    %v1121 = vunpack.c.l.b16 %v1084
    %v1122 = vunpack.c.l.b16 %v1085
    %v1123 = vunpack.c.l.b16 %v1086
    %v1124 = vpack.c.b16 %v1109, %v1108
    %v1125 = vpack.c.b16 %v1111, %v1110
    %v1126 = vpack.c.b16 %v1113, %v1112
    %v1127 = vpack.c.b16 %v1115, %v1114
    %v1128 = vpack.c.b16 %v1117, %v1116
    %v1129 = vpack.c.b16 %v1119, %v1118
    %v1130 = vpack.c.b16 %v1121, %v1120
    %v1131 = vpack.c.b16 %v1123, %v1122
    %1140 = vmatpush.bf16.msra.mxu0 %v1131
    %1141 = vmatpush.bf16.msra.mxu0 %v1130
    %1142 = vmatpush.bf16.msra.mxu0 %v1129
    %1143 = vmatpush.bf16.msra.mxu0 %v1128
    %1144 = vmatpush.bf16.msra.mxu0 %v1127
    %1145 = vmatpush.bf16.msra.mxu0 %v1126
    %1146 = vmatpush.bf16.msra.mxu0 %v1125
    %1147 = vmatpush.bf16.msra.mxu0 %v1124
    %1148 = vmatmul.bf16.gmra.mxu0 %v952
    %v1149 = vpop.f32.mrf.mxu0
    %v1150 = vadd.f32 %v1088, %v1149
    %v1151 = vpop.f32.mrf.mxu0
    %v1152 = vadd.f32 %v1089, %v1151
    %1153 = vmatmul.bf16.gmra.mxu0 %v953
    %v1154 = vpop.f32.mrf.mxu0
    %v1155 = vadd.f32 %v1090, %v1154
    %v1156 = vpop.f32.mrf.mxu0
    %v1157 = vadd.f32 %v1091, %v1156
    %1158 = vdwg.mxu0
    %v1159 = vperm.slane %v951, 1
    %v1160 = vmul.f32 %v1045, %v1159
    %v1161 = vmul.f32 %v1050, %v1159
    %v1162 = vmul.f32 %v1055, %v1159
    %v1163 = vmul.f32 %v1060, %v1159
    %v1164 = vadd.f32 %v1150, %v1160
    %v1165 = vadd.f32 %v1152, %v1161
    %v1166 = vadd.f32 %v1155, %v1162
    %v1167 = vadd.f32 %v1157, %v1163
    %v1168 = vadd.s32 %v235, 32
    %v1169 = vadd.s32 %v235, 40
    %v1170 = vadd.s32 %v235, 48
    %v1171 = vadd.s32 %v235, 56
    %v1172 = vmul.u32 %v240, 2
    %v1173 = vsub.s32 %v235, %v1172
    %v1174 = vsub.s32 %v236, %v1172
    %v1175 = vsub.s32 %v237, %v1172
    %v1176 = vsub.s32 %v238, %v1172
    %v1177 = vsub.s32 %v1168, %v1172
    %v1178 = vsub.s32 %v1169, %v1172
    %v1179 = vsub.s32 %v1170, %v1172
    %v1180 = vsub.s32 %v1171, %v1172
    %vm1181 = vcmp.eq.s32.totalorder %v1173, 0
    %vm1182 = vcmp.eq.s32.totalorder %v1174, 0
    %vm1183 = vcmp.eq.s32.totalorder %v1175, 0
    %vm1184 = vcmp.eq.s32.totalorder %v1176, 0
    %vm1185 = vcmp.eq.s32.totalorder %v1177, 0
    %vm1186 = vcmp.eq.s32.totalorder %v1178, 0
    %vm1187 = vcmp.eq.s32.totalorder %v1179, 0
    %vm1188 = vcmp.eq.s32.totalorder %v1180, 0
    %vm1189 = vcmp.eq.s32.totalorder %v1173, 1
    %vm1190 = vcmp.eq.s32.totalorder %v1174, 1
    %vm1191 = vcmp.eq.s32.totalorder %v1175, 1
    %vm1192 = vcmp.eq.s32.totalorder %v1176, 1
    %vm1193 = vcmp.eq.s32.totalorder %v1177, 1
    %vm1194 = vcmp.eq.s32.totalorder %v1178, 1
    %vm1195 = vcmp.eq.s32.totalorder %v1179, 1
    %vm1196 = vcmp.eq.s32.totalorder %v1180, 1
    %vm1197 = vmor %vm1181, %vm1189
    %vm1198 = vmor %vm1182, %vm1190
    %vm1199 = vmor %vm1183, %vm1191
    %vm1200 = vmor %vm1184, %vm1192
    %vm1201 = vmor %vm1185, %vm1193
    %vm1202 = vmor %vm1186, %vm1194
    %vm1203 = vmor %vm1187, %vm1195
    %vm1204 = vmor %vm1188, %vm1196
    %v1205 = vsel %vm1197, 1, 0
    %v1206 = vsel %vm1198, 1, 0
    %v1207 = vsel %vm1199, 1, 0
    %v1208 = vsel %vm1200, 1, 0
    %v1209 = vsel %vm1201, 1, 0
    %v1210 = vsel %vm1202, 1, 0
    %v1211 = vsel %vm1203, 1, 0
    %v1212 = vsel %vm1204, 1, 0
    %v1213 = vcvt.s32.f32 %v1205
    %v1214 = vcvt.s32.f32 %v1206
    %v1215 = vcvt.s32.f32 %v1207
    %v1216 = vcvt.s32.f32 %v1208
    %v1217 = vcvt.s32.f32 %v1209
    %v1218 = vcvt.s32.f32 %v1210
    %v1219 = vcvt.s32.f32 %v1211
    %v1220 = vcvt.s32.f32 %v1212
    %v1221 = vpack.c.bf16 %v227, %v226
    %v1222 = vpack.c.bf16 %v229, %v228
    %v1223 = vpack.c.bf16 %v231, %v230
    %v1224 = vpack.c.bf16 %v233, %v232
    %v1225 = vld [vmem:[#allocation8] sm:$0xf]
    %v1226 = vld [vmem:[#allocation8 + $0x4] sm:$0xf]
    %v1227 = vld [vmem:[#allocation8 + $0x8] sm:$0xf]
    %v1228 = vld [vmem:[#allocation8 + $0xc] sm:$0xf]
    %v1233 = vunpack.c.l.b16 %v1225
    %v1234 = vunpack.c.l.b16 %v1226
    %v1235 = vunpack.c.l.b16 %v1227
    %v1236 = vunpack.c.l.b16 %v1228
    %v1237 = vpack.c.b16 %v1234, %v1233
    %v1238 = vpack.c.b16 %v1236, %v1235
    %v1242 = vsel %vm321, %v1221, 0
    %v1245 = vsel %vm321, %v1222, 0
    %v1248 = vsel %vm321, %v1223, 0
    %v1251 = vsel %vm321, %v1224, 0
    %1253 = vmatpush.bf16.msra.mxu0 0
    %1254 = vmatpush.bf16.msra.mxu0 0
    %1255 = vmatpush.bf16.msra.mxu0 0
    %1256 = vmatpush.bf16.msra.mxu0 0
    %1257 = vmatpush.bf16.msra.mxu0 0
    %1258 = vmatpush.bf16.msra.mxu0 0
    %1259 = vmatpush.bf16.msra.mxu0 %v1238
    %1260 = vmatpush.bf16.msra.mxu0 %v1237
    %1261 = vmatmul.bf16.gmra.mxu0 %v1242
    %v1262 = vpop.f32.mrf.mxu0
    %v1263 = vadd.f32 0.0, %v1262
    %v1264 = vpop.f32.mrf.mxu0
    %v1265 = vadd.f32 0.0, %v1264
    %1266 = vmatmul.bf16.gmra.mxu0 %v1245
    %v1267 = vpop.f32.mrf.mxu0
    %v1268 = vadd.f32 0.0, %v1267
    %v1269 = vpop.f32.mrf.mxu0
    %v1270 = vadd.f32 0.0, %v1269
    %1271 = vmatmul.bf16.gmra.mxu0 %v1248
    %v1272 = vpop.f32.mrf.mxu0
    %v1273 = vadd.f32 0.0, %v1272
    %v1274 = vpop.f32.mrf.mxu0
    %v1275 = vadd.f32 0.0, %v1274
    %1276 = vmatmul.bf16.gmra.mxu0 %v1251
    %v1277 = vpop.f32.mrf.mxu0
    %v1278 = vadd.f32 0.0, %v1277
    %v1279 = vpop.f32.mrf.mxu0
    %v1280 = vadd.f32 0.0, %v1279
    %1281 = vdwg.mxu0
    %v1283 = vsel %vm321, %v1213, 0
    %v1286 = vsel %vm321, %v1214, 0
    %v1289 = vsel %vm321, %v1215, 0
    %v1292 = vsel %vm321, %v1216, 0
    %v1295 = vsel %vm321, %v1217, 0
    %v1298 = vsel %vm321, %v1218, 0
    %v1301 = vsel %vm321, %v1219, 0
    %v1304 = vsel %vm321, %v1220, 0
    %1306 = vmatpush.msra.mxu0 0.0
    %1307 = vmatpush.msra.mxu0 0.0
    %1308 = vmatpush.msra.mxu0 0.0
    %1309 = vmatpush.msra.mxu0 0.0
    %1310 = vmatpush.msra.mxu0 0.0
    %1311 = vmatpush.msra.mxu0 0.0
    %1312 = vmatpush.msra.mxu0 0.0
    %1313 = vmatpush.msra.mxu0 0.0
    %1314 = vmatpush.msra.mxu0 0.0
    %1315 = vmatpush.msra.mxu0 0.0
    %1316 = vmatpush.msra.mxu0 0.0
    %1317 = vmatpush.msra.mxu0 0.0
    %1318 = vmatpush.msra.mxu0 %v1070
    %1319 = vmatpush.msra.mxu0 %v1069
    %1320 = vmatpush.msra.mxu0 %v1068
    %1321 = vmatpush.msra.mxu0 %v1067
    %1322 = vmatmul.f32.gmra.mxu0 %v1283
    %v1323 = vpop.f32.mrf.mxu0
    %v1324 = vadd.f32 %v1263, %v1323
    %1325 = vmatmul.f32.gmra.mxu0 %v1286
    %v1326 = vpop.f32.mrf.mxu0
    %v1327 = vadd.f32 %v1265, %v1326
    %1328 = vmatmul.f32.gmra.mxu0 %v1289
    %v1329 = vpop.f32.mrf.mxu0
    %v1330 = vadd.f32 %v1268, %v1329
    %1331 = vmatmul.f32.gmra.mxu0 %v1292
    %v1332 = vpop.f32.mrf.mxu0
    %v1333 = vadd.f32 %v1270, %v1332
    %1334 = vmatmul.f32.gmra.mxu0 %v1295
    %v1335 = vpop.f32.mrf.mxu0
    %v1336 = vadd.f32 %v1273, %v1335
    %1337 = vmatmul.f32.gmra.mxu0 %v1298
    %v1338 = vpop.f32.mrf.mxu0
    %v1339 = vadd.f32 %v1275, %v1338
    %1340 = vmatmul.f32.gmra.mxu0 %v1301
    %v1341 = vpop.f32.mrf.mxu0
    %v1342 = vadd.f32 %v1278, %v1341
    %1343 = vmatmul.f32.gmra.mxu0 %v1304
    %v1344 = vpop.f32.mrf.mxu0
    %v1345 = vadd.f32 %v1280, %v1344
    %1346 = vdwg.mxu0
    %v1347 = vld [vmem:[#allocation9] sm:$0x1]
    %v1349 = vperm.slane %v1347, 0
    %v1351 = vadd.f32 %v1324, %v1349
    %v1352 = vadd.f32 %v1327, %v1349
    %v1353 = vadd.f32 %v1330, %v1349
    %v1354 = vadd.f32 %v1333, %v1349
    %v1355 = vadd.f32 %v1336, %v1349
    %v1356 = vadd.f32 %v1339, %v1349
    %v1357 = vadd.f32 %v1342, %v1349
    %v1358 = vadd.f32 %v1345, %v1349
    %v1359 = vld [vmem:[%s19] sm:$0xf]
    %v1360 = vld [vmem:[%s19 + $0x4] sm:$0xf]
    %v1361 = vld [vmem:[%s19 + $0x8] sm:$0xf]
    %v1362 = vld [vmem:[%s19 + $0xc] sm:$0xf]
    %v1367 = vunpack.c.l.b16 %v1359
    %v1368 = vunpack.c.l.b16 %v1360
    %v1369 = vunpack.c.l.b16 %v1361
    %v1370 = vunpack.c.l.b16 %v1362
    %v1371 = vpack.c.b16 %v1368, %v1367
    %v1372 = vpack.c.b16 %v1370, %v1369
    %1375 = vmatpush.bf16.msra.mxu0 0
    %1376 = vmatpush.bf16.msra.mxu0 0
    %1377 = vmatpush.bf16.msra.mxu0 0
    %1378 = vmatpush.bf16.msra.mxu0 0
    %1379 = vmatpush.bf16.msra.mxu0 0
    %1380 = vmatpush.bf16.msra.mxu0 0
    %1381 = vmatpush.bf16.msra.mxu0 %v1372
    %1382 = vmatpush.bf16.msra.mxu0 %v1371
    %1383 = vmatmul.bf16.gmra.mxu0 %v1242
    %v1384 = vpop.f32.mrf.mxu0
    %v1385 = vadd.f32 0.0, %v1384
    %v1386 = vpop.f32.mrf.mxu0
    %v1387 = vadd.f32 0.0, %v1386
    %1388 = vmatmul.bf16.gmra.mxu0 %v1245
    %v1389 = vpop.f32.mrf.mxu0
    %v1390 = vadd.f32 0.0, %v1389
    %v1391 = vpop.f32.mrf.mxu0
    %v1392 = vadd.f32 0.0, %v1391
    %1393 = vmatmul.bf16.gmra.mxu0 %v1248
    %v1394 = vpop.f32.mrf.mxu0
    %v1395 = vadd.f32 0.0, %v1394
    %v1396 = vpop.f32.mrf.mxu0
    %v1397 = vadd.f32 0.0, %v1396
    %1398 = vmatmul.bf16.gmra.mxu0 %v1251
    %v1399 = vpop.f32.mrf.mxu0
    %v1400 = vadd.f32 0.0, %v1399
    %v1401 = vpop.f32.mrf.mxu0
    %v1402 = vadd.f32 0.0, %v1401
    %1403 = vdwg.mxu0
    %1404 = vmatpush.msra.mxu0 0.0
    %1405 = vmatpush.msra.mxu0 0.0
    %1406 = vmatpush.msra.mxu0 0.0
    %1407 = vmatpush.msra.mxu0 0.0
    %1408 = vmatpush.msra.mxu0 0.0
    %1409 = vmatpush.msra.mxu0 0.0
    %1410 = vmatpush.msra.mxu0 0.0
    %1411 = vmatpush.msra.mxu0 0.0
    %1412 = vmatpush.msra.mxu0 0.0
    %1413 = vmatpush.msra.mxu0 0.0
    %1414 = vmatpush.msra.mxu0 0.0
    %1415 = vmatpush.msra.mxu0 0.0
    %1416 = vmatpush.msra.mxu0 %v1167
    %1417 = vmatpush.msra.mxu0 %v1166
    %1418 = vmatpush.msra.mxu0 %v1165
    %1419 = vmatpush.msra.mxu0 %v1164
    %1420 = vmatmul.f32.gmra.mxu0 %v1283
    %v1421 = vpop.f32.mrf.mxu0
    %v1422 = vadd.f32 %v1385, %v1421
    %1423 = vmatmul.f32.gmra.mxu0 %v1286
    %v1424 = vpop.f32.mrf.mxu0
    %v1425 = vadd.f32 %v1387, %v1424
    %1426 = vmatmul.f32.gmra.mxu0 %v1289
    %v1427 = vpop.f32.mrf.mxu0
    %v1428 = vadd.f32 %v1390, %v1427
    %1429 = vmatmul.f32.gmra.mxu0 %v1292
    %v1430 = vpop.f32.mrf.mxu0
    %v1431 = vadd.f32 %v1392, %v1430
    %1432 = vmatmul.f32.gmra.mxu0 %v1295
    %v1433 = vpop.f32.mrf.mxu0
    %v1434 = vadd.f32 %v1395, %v1433
    %1435 = vmatmul.f32.gmra.mxu0 %v1298
    %v1436 = vpop.f32.mrf.mxu0
    %v1437 = vadd.f32 %v1397, %v1436
    %1438 = vmatmul.f32.gmra.mxu0 %v1301
    %v1439 = vpop.f32.mrf.mxu0
    %v1440 = vadd.f32 %v1400, %v1439
    %1441 = vmatmul.f32.gmra.mxu0 %v1304
    %v1442 = vpop.f32.mrf.mxu0
    %v1443 = vadd.f32 %v1402, %v1442
    %1444 = vdwg.mxu0
    %v1445 = vld [vmem:[#allocation11] sm:$0x1]
    %v1447 = vperm.slane %v1445, 0
    %v1449 = vadd.f32 %v1422, %v1447
    %v1450 = vadd.f32 %v1425, %v1447
    %v1451 = vadd.f32 %v1428, %v1447
    %v1452 = vadd.f32 %v1431, %v1447
    %v1453 = vadd.f32 %v1434, %v1447
    %v1454 = vadd.f32 %v1437, %v1447
    %v1455 = vadd.f32 %v1440, %v1447
    %v1456 = vadd.f32 %v1443, %v1447
    %v1457 = vmul.f32 %v1351, %v1351
    %v1458 = vmul.f32 %v1352, %v1352
    %v1459 = vmul.f32 %v1353, %v1353
    %v1460 = vmul.f32 %v1354, %v1354
    %v1461 = vmul.f32 %v1355, %v1355
    %v1462 = vmul.f32 %v1356, %v1356
    %v1463 = vmul.f32 %v1357, %v1357
    %v1464 = vmul.f32 %v1358, %v1358
    %v1465 = vsel %vm321, %v1457, 0.0
    %1466 = vadd.xlane.f32.xlu0 %v1465
    %v1467 = vpop.xlane.xlu0 %1466
    %v1468 = vsel %vm321, %v1458, 0.0
    %1469 = vadd.xlane.f32.xlu0 %v1468
    %v1470 = vpop.xlane.xlu0 %1469
    %v1471 = vsel %vm321, %v1459, 0.0
    %1472 = vadd.xlane.f32.xlu0 %v1471
    %v1473 = vpop.xlane.xlu0 %1472
    %v1474 = vsel %vm321, %v1460, 0.0
    %1475 = vadd.xlane.f32.xlu0 %v1474
    %v1476 = vpop.xlane.xlu0 %1475
    %v1477 = vsel %vm321, %v1461, 0.0
    %1478 = vadd.xlane.f32.xlu0 %v1477
    %v1479 = vpop.xlane.xlu0 %1478
    %v1480 = vsel %vm321, %v1462, 0.0
    %1481 = vadd.xlane.f32.xlu0 %v1480
    %v1482 = vpop.xlane.xlu0 %1481
    %v1483 = vsel %vm321, %v1463, 0.0
    %1484 = vadd.xlane.f32.xlu0 %v1483
    %v1485 = vpop.xlane.xlu0 %1484
    %v1486 = vsel %vm321, %v1464, 0.0
    %1487 = vadd.xlane.f32.xlu0 %v1486
    %v1488 = vpop.xlane.xlu0 %1487
    %v1489 = vmax.f32 %v1467, 1e-24
    %v1490 = vmax.f32 %v1470, 1e-24
    %v1491 = vmax.f32 %v1473, 1e-24
    %v1492 = vmax.f32 %v1476, 1e-24
    %v1493 = vmax.f32 %v1479, 1e-24
    %v1494 = vmax.f32 %v1482, 1e-24
    %v1495 = vmax.f32 %v1485, 1e-24
    %v1496 = vmax.f32 %v1488, 1e-24
    %v1497 = vrsqrt.pop %v1489
    %v1498 = vmul.f32 %v1497, %v1489
    %v1499 = vmul.f32 %v1498, %v1497
    %v1500 = vmul.f32 0.5, %v1499
    %v1501 = vsub.f32 1.5, %v1500
    %v1502 = vmul.f32 %v1497, %v1501
    %vm1503 = vweird.f32 %v1489
    %vm1504 = vweird.f32 %v1497
    %vm1505 = vmor %vm1503, %vm1504
    %v1506 = vsel %vm1505, %v1497, %v1502
    %v1507 = vrsqrt.pop %v1490
    %v1508 = vmul.f32 %v1507, %v1490
    %v1509 = vmul.f32 %v1508, %v1507
    %v1510 = vmul.f32 0.5, %v1509
    %v1511 = vsub.f32 1.5, %v1510
    %v1512 = vmul.f32 %v1507, %v1511
    %vm1513 = vweird.f32 %v1490
    %vm1514 = vweird.f32 %v1507
    %vm1515 = vmor %vm1513, %vm1514
    %v1516 = vsel %vm1515, %v1507, %v1512
    %v1517 = vrsqrt.pop %v1491
    %v1518 = vmul.f32 %v1517, %v1491
    %v1519 = vmul.f32 %v1518, %v1517
    %v1520 = vmul.f32 0.5, %v1519
    %v1521 = vsub.f32 1.5, %v1520
    %v1522 = vmul.f32 %v1517, %v1521
    %vm1523 = vweird.f32 %v1491
    %vm1524 = vweird.f32 %v1517
    %vm1525 = vmor %vm1523, %vm1524
    %v1526 = vsel %vm1525, %v1517, %v1522
    %v1527 = vrsqrt.pop %v1492
    %v1528 = vmul.f32 %v1527, %v1492
    %v1529 = vmul.f32 %v1528, %v1527
    %v1530 = vmul.f32 0.5, %v1529
    %v1531 = vsub.f32 1.5, %v1530
    %v1532 = vmul.f32 %v1527, %v1531
    %vm1533 = vweird.f32 %v1492
    %vm1534 = vweird.f32 %v1527
    %vm1535 = vmor %vm1533, %vm1534
    %v1536 = vsel %vm1535, %v1527, %v1532
    %v1537 = vrsqrt.pop %v1493
    %v1538 = vmul.f32 %v1537, %v1493
    %v1539 = vmul.f32 %v1538, %v1537
    %v1540 = vmul.f32 0.5, %v1539
    %v1541 = vsub.f32 1.5, %v1540
    %v1542 = vmul.f32 %v1537, %v1541
    %vm1543 = vweird.f32 %v1493
    %vm1544 = vweird.f32 %v1537
    %vm1545 = vmor %vm1543, %vm1544
    %v1546 = vsel %vm1545, %v1537, %v1542
    %v1547 = vrsqrt.pop %v1494
    %v1548 = vmul.f32 %v1547, %v1494
    %v1549 = vmul.f32 %v1548, %v1547
    %v1550 = vmul.f32 0.5, %v1549
    %v1551 = vsub.f32 1.5, %v1550
    %v1552 = vmul.f32 %v1547, %v1551
    %vm1553 = vweird.f32 %v1494
    %vm1554 = vweird.f32 %v1547
    %vm1555 = vmor %vm1553, %vm1554
    %v1556 = vsel %vm1555, %v1547, %v1552
    %v1557 = vrsqrt.pop %v1495
    %v1558 = vmul.f32 %v1557, %v1495
    %v1559 = vmul.f32 %v1558, %v1557
    %v1560 = vmul.f32 0.5, %v1559
    %v1561 = vsub.f32 1.5, %v1560
    %v1562 = vmul.f32 %v1557, %v1561
    %vm1563 = vweird.f32 %v1495
    %vm1564 = vweird.f32 %v1557
    %vm1565 = vmor %vm1563, %vm1564
    %v1566 = vsel %vm1565, %v1557, %v1562
    %v1567 = vrsqrt.pop %v1496
    %v1568 = vmul.f32 %v1567, %v1496
    %v1569 = vmul.f32 %v1568, %v1567
    %v1570 = vmul.f32 0.5, %v1569
    %v1571 = vsub.f32 1.5, %v1570
    %v1572 = vmul.f32 %v1567, %v1571
    %vm1573 = vweird.f32 %v1496
    %vm1574 = vweird.f32 %v1567
    %vm1575 = vmor %vm1573, %vm1574
    %v1576 = vsel %vm1575, %v1567, %v1572
    %v1577 = vmul.f32 %v1351, %v1506
    %v1578 = vmul.f32 %v1352, %v1516
    %v1579 = vmul.f32 %v1353, %v1526
    %v1580 = vmul.f32 %v1354, %v1536
    %v1581 = vmul.f32 %v1355, %v1546
    %v1582 = vmul.f32 %v1356, %v1556
    %v1583 = vmul.f32 %v1357, %v1566
    %v1584 = vmul.f32 %v1358, %v1576
    %1585 = vst.msk [vmem:[%s24] sm:$0xff] %vm321, %v1577
    %1586 = vst.msk [vmem:[%s24 + $0x8] sm:$0xff] %vm321, %v1578
    %1587 = vst.msk [vmem:[%s24 + $0x10] sm:$0xff] %vm321, %v1579
    %1588 = vst.msk [vmem:[%s24 + $0x18] sm:$0xff] %vm321, %v1580
    %1589 = vst.msk [vmem:[%s24 + $0x20] sm:$0xff] %vm321, %v1581
    %1590 = vst.msk [vmem:[%s24 + $0x28] sm:$0xff] %vm321, %v1582
    %1591 = vst.msk [vmem:[%s24 + $0x30] sm:$0xff] %vm321, %v1583
    %1592 = vst.msk [vmem:[%s24 + $0x38] sm:$0xff] %vm321, %v1584
    %v1593 = vxor.u32 %v1449, 2147483648
    %v1594 = vxor.u32 %v1450, 2147483648
    %v1595 = vxor.u32 %v1451, 2147483648
    %v1596 = vxor.u32 %v1452, 2147483648
    %v1597 = vxor.u32 %v1453, 2147483648
    %v1598 = vxor.u32 %v1454, 2147483648
    %v1599 = vxor.u32 %v1455, 2147483648
    %v1600 = vxor.u32 %v1456, 2147483648
    %v1601 = vmul.f32 %v1593, 1.442695
    %v1602 = vpow.pop %v1601
    %v1603 = vmul.f32 %v1594, 1.442695
    %v1604 = vpow.pop %v1603
    %v1605 = vmul.f32 %v1595, 1.442695
    %v1606 = vpow.pop %v1605
    %v1607 = vmul.f32 %v1596, 1.442695
    %v1608 = vpow.pop %v1607
    %v1609 = vmul.f32 %v1597, 1.442695
    %v1610 = vpow.pop %v1609
    %v1611 = vmul.f32 %v1598, 1.442695
    %v1612 = vpow.pop %v1611
    %v1613 = vmul.f32 %v1599, 1.442695
    %v1614 = vpow.pop %v1613
    %v1615 = vmul.f32 %v1600, 1.442695
    %v1616 = vpow.pop %v1615
    %v1617 = vadd.f32 %v1602, 1.0
    %v1618 = vadd.f32 %v1604, 1.0
    %v1619 = vadd.f32 %v1606, 1.0
    %v1620 = vadd.f32 %v1608, 1.0
    %v1621 = vadd.f32 %v1610, 1.0
    %v1622 = vadd.f32 %v1612, 1.0
    %v1623 = vadd.f32 %v1614, 1.0
    %v1624 = vadd.f32 %v1616, 1.0
    %v1625 = vrcp.pop %v1617
    %v1626 = vmul.f32 %v1617, %v1625
    %v1627 = vsub.f32 1.0, %v1626
    %v1628 = vmul.f32 %v1625, %v1627
    %v1629 = vadd.f32 %v1625, %v1628
    %vm1630 = vweird.f32 %v1617
    %vm1631 = vweird.f32 %v1625
    %vm1632 = vmor %vm1630, %vm1631
    %v1633 = vsel %vm1632, %v1625, %v1629
    %v1634 = vand.u32 2147483647, %v1617
    %vm1635 = vcmp.eq.f32.partialorder %v1634, 8.507059e+37
    %v1636 = vand.u32 %v1617, 2147483648
    %v1637 = vor.u32 1.1754944e-38, %v1636
    %v1638 = vsel %vm1635, %v1637, %v1633
    %v1639 = vmul.f32 1.0, %v1638
    %v1640 = vrcp.pop %v1618
    %v1641 = vmul.f32 %v1618, %v1640
    %v1642 = vsub.f32 1.0, %v1641
    %v1643 = vmul.f32 %v1640, %v1642
    %v1644 = vadd.f32 %v1640, %v1643
    %vm1645 = vweird.f32 %v1618
    %vm1646 = vweird.f32 %v1640
    %vm1647 = vmor %vm1645, %vm1646
    %v1648 = vsel %vm1647, %v1640, %v1644
    %v1649 = vand.u32 2147483647, %v1618
    %vm1650 = vcmp.eq.f32.partialorder %v1649, 8.507059e+37
    %v1651 = vand.u32 %v1618, 2147483648
    %v1652 = vor.u32 1.1754944e-38, %v1651
    %v1653 = vsel %vm1650, %v1652, %v1648
    %v1654 = vmul.f32 1.0, %v1653
    %v1655 = vrcp.pop %v1619
    %v1656 = vmul.f32 %v1619, %v1655
    %v1657 = vsub.f32 1.0, %v1656
    %v1658 = vmul.f32 %v1655, %v1657
    %v1659 = vadd.f32 %v1655, %v1658
    %vm1660 = vweird.f32 %v1619
    %vm1661 = vweird.f32 %v1655
    %vm1662 = vmor %vm1660, %vm1661
    %v1663 = vsel %vm1662, %v1655, %v1659
    %v1664 = vand.u32 2147483647, %v1619
    %vm1665 = vcmp.eq.f32.partialorder %v1664, 8.507059e+37
    %v1666 = vand.u32 %v1619, 2147483648
    %v1667 = vor.u32 1.1754944e-38, %v1666
    %v1668 = vsel %vm1665, %v1667, %v1663
    %v1669 = vmul.f32 1.0, %v1668
    %v1670 = vrcp.pop %v1620
    %v1671 = vmul.f32 %v1620, %v1670
    %v1672 = vsub.f32 1.0, %v1671
    %v1673 = vmul.f32 %v1670, %v1672
    %v1674 = vadd.f32 %v1670, %v1673
    %vm1675 = vweird.f32 %v1620
    %vm1676 = vweird.f32 %v1670
    %vm1677 = vmor %vm1675, %vm1676
    %v1678 = vsel %vm1677, %v1670, %v1674
    %v1679 = vand.u32 2147483647, %v1620
    %vm1680 = vcmp.eq.f32.partialorder %v1679, 8.507059e+37
    %v1681 = vand.u32 %v1620, 2147483648
    %v1682 = vor.u32 1.1754944e-38, %v1681
    %v1683 = vsel %vm1680, %v1682, %v1678
    %v1684 = vmul.f32 1.0, %v1683
    %v1685 = vrcp.pop %v1621
    %v1686 = vmul.f32 %v1621, %v1685
    %v1687 = vsub.f32 1.0, %v1686
    %v1688 = vmul.f32 %v1685, %v1687
    %v1689 = vadd.f32 %v1685, %v1688
    %vm1690 = vweird.f32 %v1621
    %vm1691 = vweird.f32 %v1685
    %vm1692 = vmor %vm1690, %vm1691
    %v1693 = vsel %vm1692, %v1685, %v1689
    %v1694 = vand.u32 2147483647, %v1621
    %vm1695 = vcmp.eq.f32.partialorder %v1694, 8.507059e+37
    %v1696 = vand.u32 %v1621, 2147483648
    %v1697 = vor.u32 1.1754944e-38, %v1696
    %v1698 = vsel %vm1695, %v1697, %v1693
    %v1699 = vmul.f32 1.0, %v1698
    %v1700 = vrcp.pop %v1622
    %v1701 = vmul.f32 %v1622, %v1700
    %v1702 = vsub.f32 1.0, %v1701
    %v1703 = vmul.f32 %v1700, %v1702
    %v1704 = vadd.f32 %v1700, %v1703
    %vm1705 = vweird.f32 %v1622
    %vm1706 = vweird.f32 %v1700
    %vm1707 = vmor %vm1705, %vm1706
    %v1708 = vsel %vm1707, %v1700, %v1704
    %v1709 = vand.u32 2147483647, %v1622
    %vm1710 = vcmp.eq.f32.partialorder %v1709, 8.507059e+37
    %v1711 = vand.u32 %v1622, 2147483648
    %v1712 = vor.u32 1.1754944e-38, %v1711
    %v1713 = vsel %vm1710, %v1712, %v1708
    %v1714 = vmul.f32 1.0, %v1713
    %v1715 = vrcp.pop %v1623
    %v1716 = vmul.f32 %v1623, %v1715
    %v1717 = vsub.f32 1.0, %v1716
    %v1718 = vmul.f32 %v1715, %v1717
    %v1719 = vadd.f32 %v1715, %v1718
    %vm1720 = vweird.f32 %v1623
    %vm1721 = vweird.f32 %v1715
    %vm1722 = vmor %vm1720, %vm1721
    %v1723 = vsel %vm1722, %v1715, %v1719
    %v1724 = vand.u32 2147483647, %v1623
    %vm1725 = vcmp.eq.f32.partialorder %v1724, 8.507059e+37
    %v1726 = vand.u32 %v1623, 2147483648
    %v1727 = vor.u32 1.1754944e-38, %v1726
    %v1728 = vsel %vm1725, %v1727, %v1723
    %v1729 = vmul.f32 1.0, %v1728
    %v1730 = vrcp.pop %v1624
    %v1731 = vmul.f32 %v1624, %v1730
    %v1732 = vsub.f32 1.0, %v1731
    %v1733 = vmul.f32 %v1730, %v1732
    %v1734 = vadd.f32 %v1730, %v1733
    %vm1735 = vweird.f32 %v1624
    %vm1736 = vweird.f32 %v1730
    %vm1737 = vmor %vm1735, %vm1736
    %v1738 = vsel %vm1737, %v1730, %v1734
    %v1739 = vand.u32 2147483647, %v1624
    %vm1740 = vcmp.eq.f32.partialorder %v1739, 8.507059e+37
    %v1741 = vand.u32 %v1624, 2147483648
    %v1742 = vor.u32 1.1754944e-38, %v1741
    %v1743 = vsel %vm1740, %v1742, %v1738
    %v1744 = vmul.f32 1.0, %v1743
    %v1745 = vmax.f32 %v1639, 0.0
    %v1746 = vmax.f32 %v1654, 0.0
    %v1747 = vmax.f32 %v1669, 0.0
    %v1748 = vmax.f32 %v1684, 0.0
    %v1749 = vmax.f32 %v1699, 0.0
    %v1750 = vmax.f32 %v1714, 0.0
    %v1751 = vmax.f32 %v1729, 0.0
    %v1752 = vmax.f32 %v1744, 0.0
    %v1753 = vmin.f32 %v1745, 1.0
    %v1754 = vmin.f32 %v1746, 1.0
    %v1755 = vmin.f32 %v1747, 1.0
    %v1756 = vmin.f32 %v1748, 1.0
    %v1757 = vmin.f32 %v1749, 1.0
    %v1758 = vmin.f32 %v1750, 1.0
    %v1759 = vmin.f32 %v1751, 1.0
    %v1760 = vmin.f32 %v1752, 1.0
    %vm1761 = vcmp.ne.f32.partialorder %v1753, %v1753
    %vm1762 = vcmp.ne.f32.partialorder %v1754, %v1754
    %vm1763 = vcmp.ne.f32.partialorder %v1755, %v1755
    %vm1764 = vcmp.ne.f32.partialorder %v1756, %v1756
    %vm1765 = vcmp.ne.f32.partialorder %v1757, %v1757
    %vm1766 = vcmp.ne.f32.partialorder %v1758, %v1758
    %vm1767 = vcmp.ne.f32.partialorder %v1759, %v1759
    %vm1768 = vcmp.ne.f32.partialorder %v1760, %v1760
    %v1769 = vsel %vm1761, 0.0, %v1753
    %v1770 = vsel %vm1762, 0.0, %v1754
    %v1771 = vsel %vm1763, 0.0, %v1755
    %v1772 = vsel %vm1764, 0.0, %v1756
    %v1773 = vsel %vm1765, 0.0, %v1757
    %v1774 = vsel %vm1766, 0.0, %v1758
    %v1775 = vsel %vm1767, 0.0, %v1759
    %v1776 = vsel %vm1768, 0.0, %v1760
    %vm1777 = vcmask 15360
    %1778 = vst.msk [vmem:[%s25] sm:$0xff] %vm1777, %v1769
    %1779 = vst.msk [vmem:[%s25 + $0x8] sm:$0xff] %vm1777, %v1770
    %1780 = vst.msk [vmem:[%s25 + $0x10] sm:$0xff] %vm1777, %v1771
    %1781 = vst.msk [vmem:[%s25 + $0x18] sm:$0xff] %vm1777, %v1772
    %1782 = vst.msk [vmem:[%s25 + $0x20] sm:$0xff] %vm1777, %v1773
    %1783 = vst.msk [vmem:[%s25 + $0x28] sm:$0xff] %vm1777, %v1774
    %1784 = vst.msk [vmem:[%s25 + $0x30] sm:$0xff] %vm1777, %v1775
    %1785 = vst.msk [vmem:[%s25 + $0x38] sm:$0xff] %vm1777, %v1776
    // Predicated region
    $region118: #{kpfcnn_forward.1} parent=1 // pred_check
      _
    $region119: #{kpfcnn_forward.1} parent=1 // pred_check_branch
      %1787 = sbr.rel (0) target = $region121
    $region120: #{kpfcnn_forward.1} parent=1 // pred_region
      _
    $region121: #{kpfcnn_forward.1} parent=1 // pred_fallthru
      _
    // Predicated region
    $region122: #{kpfcnn_forward.1} parent=1 // pred_check
      _
    $region123: #{kpfcnn_forward.1} parent=1 // pred_check_branch
      %1789 = sbr.rel (0) target = $region125
    $region124: #{kpfcnn_forward.1} parent=1 // pred_region
      _
    $region125: #{kpfcnn_forward.1} parent=1 // pred_fallthru
      _
    // Predicated region
    $region126: #{kpfcnn_forward.1} parent=1 // pred_check
      _
    $region127: #{kpfcnn_forward.1} parent=1 // pred_check_branch
      %1791 = sbr.rel (0) target = $region129
    $region128: #{kpfcnn_forward.1} parent=1 // pred_region
      _
    $region129: #{kpfcnn_forward.1} parent=1 // pred_fallthru
      _
    // Predicated region
    $region130: #{kpfcnn_forward.1} parent=1 // pred_check
      _
    $region131: #{kpfcnn_forward.1} parent=1 // pred_check_branch
      %1793 = sbr.rel (0) target = $region133
    $region132: #{kpfcnn_forward.1} parent=1 // pred_region
      _
    $region133: #{kpfcnn_forward.1} parent=1 // pred_fallthru
      _
    %1794 = vsyncpa [#allocation5], 1
    %1795 = vsyncpa [#allocation7], 1
    %1796 = vsyncpa [#allocation10], 1

</llo_original>
